<compile_context>
chip_gen: v7x
topology: tpu7x:2x2x1
jax: 0.10.0
libtpu: 0.0.40
codegen_flags: <defaults>
</compile_context>

<pallas_src>
import jax
import jax.numpy as jnp
from jax import lax
from jax.experimental import pallas as pl
from jax.experimental.pallas import tpu as pltpu
import numpy as np


def _round_up(x, m):
    return (x + m - 1) // m * m


def conv_block_forward(x_nchw, conv_w, conv_b, bn_gamma, bn_beta,
                       bn_mean, bn_var, eps=1e-5, tile_rows=4096):
    """ConvBlock forward. x_nchw: (N, Cin, H, W) f32 -> (N, Cout, H, W) f32."""
    N, Cin, H, W = x_nchw.shape
    Cout = conv_w.shape[0]
    HP = H + 2
    WP = _round_up(W + 2, 8)             # 8-aligned row pitch -> kh*WP shifts are sublane-aligned
    Cout_pad = _round_up(Cout, 128)      # lane-dense output channels
    R_total = N * HP * WP                # flattened padded (n, h, w) rows
    max_off = 2 * WP + 2                 # largest tap offset (kh = kw = 2)

    # Halo block: smallest 32-aligned row count covering the largest tap offset.
    halo_r = _round_up(max_off, 32)
    # Row tile: multiple of halo_r (keeps the halo index_map in whole blocks),
    # capped at 8192 rows (~12 MiB/step incl. temporaries -> fits every
    # generation's scoped VMEM, incl. v7x's 64 MiB per TC) and capped so the
    # grid has >= 2 steps (lets the "parallel" axis use both v7x TensorCores).
    tile_r_req = _round_up(min(tile_rows, 8192), halo_r)
    half = max(halo_r, _round_up((R_total + 1) // 2, halo_r))
    tile_r = min(tile_r_req, half)
    num_tiles = pl.cdiv(R_total, tile_r)
    r_out = num_tiles * tile_r
    r_in = (num_tiles + 1) * tile_r      # tail so the current + halo blocks always exist
    blocks_per_tile = tile_r // halo_r

    # ---- glue: NCHW -> padded NHWC -> flat rows (no 9x im2col expansion) ----
    # TODO(synk): the surrounding model could stay channels-last (NHWC, bf16)
    # end-to-end and skip these wrapper transposes and the final f32 cast.
    x = jnp.transpose(x_nchw, (0, 2, 3, 1))                       # (N, H, W, Cin)
    xp = jnp.pad(x, ((0, 0), (1, 1), (1, WP - W - 1), (0, 0)))    # (N, HP, WP, Cin)
    x_flat = xp.reshape(R_total, Cin).astype(jnp.bfloat16)        # halve activation DMA
    x_flat = jnp.pad(x_flat, ((0, r_in - R_total), (0, 0)))

    # ---- fold conv bias + BatchNorm (eval mode) into weights / shift ----
    # TODO(synk): training-mode BN (batch statistics) not implemented; eval-mode
    # running stats are folded into the weights.
    bn_scale = bn_gamma / jnp.sqrt(bn_var + eps)                          # (Cout,)
    w_taps = jnp.transpose(conv_w, (2, 3, 1, 0)).reshape(9, Cin, Cout)    # tap = kh*3+kw
    w_taps = w_taps * bn_scale[None, None, :]
    w_taps = jnp.pad(w_taps, ((0, 0), (0, 0), (0, Cout_pad - Cout)))
    w_fused = w_taps.reshape(9 * Cin, Cout_pad).astype(jnp.bfloat16)      # row = tap*Cin + ci
    shift = ((conv_b - bn_mean) * bn_scale + bn_beta).astype(jnp.float32)
    shift = jnp.pad(shift, (0, Cout_pad - Cout)).reshape(1, Cout_pad)

    # Tap offsets in the flattened padded row space: output row r consumes input
    # rows r + kh*WP + kw for tap (kh, kw).  Garbage rows (padded-grid borders,
    # cross-image wrap, zero tail) are computed and discarded by the wrapper.
    offsets = tuple(kh * WP + kw for kh in range(3) for kw in range(3))

    def kernel(x_cur_ref, x_halo_ref, w_ref, shift_ref, o_ref):
        # x_cur:  (tile_r, Cin) bf16 -- this row tile.
        # x_halo: (halo_r, Cin) bf16 -- first halo_r rows of the next tile.
        # w_ref:  (9*Cin, Cout_pad) bf16, BN scale pre-folded, tap-major rows.
        # shift:  (1, Cout_pad) f32 folded BN shift.
        # o_ref:  (tile_r, Cout_pad) bf16, lane-dense.
        x = jnp.concatenate([x_cur_ref[...], x_halo_ref[...]], axis=0)   # bf16 slab
        lhs = jnp.concatenate([x[off:off + tile_r, :] for off in offsets],
                              axis=-1)                                   # (tile_r, 9*Cin) bf16
        acc = jnp.dot(lhs, w_ref[...], preferred_element_type=jnp.float32)
        o_ref[...] = jnp.maximum(acc + shift_ref[...], 0.0).astype(o_ref.dtype)

    # VMEM budget: double-buffered inputs/outputs + fused-LHS / accumulator temps.
    vmem_bytes = int(
        2 * tile_r * Cin * 2            # current tile (bf16), double-buffered
        + 2 * halo_r * Cin * 2          # halo block (bf16), double-buffered
        + 2 * 9 * Cin * Cout_pad * 2    # folded weights (bf16)
        + 2 * 8 * Cout_pad * 4          # shift (sublane-padded)
        + 2 * tile_r * Cout_pad * 2     # output block (bf16), double-buffered
        + tile_r * 128 * 2              # fused LHS temporary (lane-padded)
        + tile_r * Cout_pad * 4         # f32 accumulator temporary
    ) + (4 << 20)

    cost = pl.CostEstimate(
        flops=2 * r_out * 9 * Cin * Cout_pad,
        transcendentals=0,
        bytes_accessed=int(x_flat.size * 2 + num_tiles * halo_r * Cin * 2
                           + w_fused.size * 2 + shift.size * 4
                           + r_out * Cout_pad * 2),
    )

    out_flat = pl.pallas_call(
        kernel,
        out_shape=jax.ShapeDtypeStruct((r_out, Cout_pad), jnp.bfloat16),
        grid_spec=pltpu.PrefetchScalarGridSpec(
            num_scalar_prefetch=0,
            grid=(num_tiles,),
            in_specs=[
                pl.BlockSpec((tile_r, Cin), lambda t: (t, 0)),            # current tile
                pl.BlockSpec((halo_r, Cin),
                             lambda t: ((t + 1) * blocks_per_tile, 0)),   # small halo
                pl.BlockSpec((9 * Cin, Cout_pad), lambda t: (0, 0)),      # fused weights
                pl.BlockSpec((1, Cout_pad), lambda t: (0, 0)),            # folded shift
            ],
            out_specs=pl.BlockSpec((tile_r, Cout_pad), lambda t: (t, 0)),
        ),
        compiler_params=pltpu.CompilerParams(
            dimension_semantics=("parallel",),
            vmem_limit_bytes=vmem_bytes,
        ),
        cost_estimate=cost,
    )(x_flat, x_flat, w_fused, shift)

    # Epilogue stays in bf16 (halves the post-processing HBM passes), then a
    # single cast back to f32 to match the PyTorch module's output dtype.
    out = out_flat[:R_total, :Cout].reshape(N, HP, WP, Cout)[:, :H, :W, :]
    return jnp.transpose(out, (0, 3, 1, 2)).astype(jnp.float32)


def reference_forward(x, conv_w, conv_b, gamma, beta, mean, var, eps=1e-5):
    z = lax.conv_general_dilated(
        x, conv_w, window_strides=(1, 1), padding=((1, 1), (1, 1)),
        dimension_numbers=("NCHW", "OIHW", "NCHW"))
    z = z + conv_b.reshape(1, -1, 1, 1)
    z = (z - mean.reshape(1, -1, 1, 1)) / jnp.sqrt(var.reshape(1, -1, 1, 1) + eps)
    z = z * gamma.reshape(1, -1, 1, 1) + beta.reshape(1, -1, 1, 1)
    return jnp.maximum(z, 0.0)


if __name__ == "__main__":
    key = jax.random.PRNGKey(0)
    N, Cin, Cout, H, W = 2, 4, 32, 16, 16

    k1, k2, k3, k4, k5 = jax.random.split(key, 5)
    x = jax.random.normal(k1, (N, Cin, H, W), dtype=jnp.float32)

    # Parameters per Conv2d(Cin, Cout, 3, padding=1) + BatchNorm2d(Cout) (eval mode).
    fan_in = Cin * 3 * 3
    bound = 1.0 / np.sqrt(fan_in)
    conv_w = jax.random.uniform(k2, (Cout, Cin, 3, 3), jnp.float32, -bound, bound)
    conv_b = jax.random.uniform(k3, (Cout,), jnp.float32, -bound, bound)
    bn_gamma = 1.0 + 0.1 * jax.random.normal(k4, (Cout,), jnp.float32)
    bn_beta = 0.1 * jax.random.normal(k5, (Cout,), jnp.float32)
    bn_mean = jnp.zeros((Cout,), jnp.float32)   # default running_mean
    bn_var = jnp.ones((Cout,), jnp.float32)     # default running_var

    out = conv_block_forward(x, conv_w, conv_b, bn_gamma, bn_beta, bn_mean, bn_var)
    out = jax.block_until_ready(out)

    ref = reference_forward(x, conv_w, conv_b, bn_gamma, bn_beta, bn_mean, bn_var)
    # bf16 activations/weights/output (f32 accumulation) -> loosened tolerance.
    np.testing.assert_allclose(np.asarray(out), np.asarray(ref), rtol=2e-2, atol=2e-2)

    assert out.shape == (N, Cout, H, W)
    print("KERNEL_OK")
</pallas_src>

<mosaic_0001>
module attributes {stable_mosaic.version = 11 : i64} {
  func.func @kernel(%arg0: i32, %arg1: memref<448x4xbf16, #tpu.memory_space<vmem>>, %arg2: memref<64x4xbf16, #tpu.memory_space<vmem>>, %arg3: memref<36x128xbf16, #tpu.memory_space<vmem>>, %arg4: memref<1x128xf32, #tpu.memory_space<vmem>>, %arg5: memref<448x128xbf16, #tpu.memory_space<vmem>>) attributes {dimension_semantics = [#tpu.dimension_semantics<parallel>], iteration_bounds = array<i64: 2>, scalar_prefetch = 0 : i64, scratch_operands = 0 : i64, tpu.core_type = #tpu.core_type<tc>, window_params = [{transform_indices = @transform_0, window_bounds = array<i64: 448, 4>}, {transform_indices = @transform_1, window_bounds = array<i64: 64, 4>}, {pipeline_mode = #tpu.pipeline_mode<synchronous>, transform_indices = @transform_2, window_bounds = array<i64: 36, 128>}, {pipeline_mode = #tpu.pipeline_mode<synchronous>, transform_indices = @transform_3, window_bounds = array<i64: 1, 128>}, {transform_indices = @transform_4, window_bounds = array<i64: 448, 128>}]} {
    %c0 = arith.constant 0 : index
    %c0_0 = arith.constant 0 : index
    %0 = vector.load %arg1[%c0, %c0_0] : memref<448x4xbf16, #tpu.memory_space<vmem>>, vector<448x4xbf16>
    %c0_1 = arith.constant 0 : index
    %c0_2 = arith.constant 0 : index
    %1 = vector.load %arg2[%c0_1, %c0_2] : memref<64x4xbf16, #tpu.memory_space<vmem>>, vector<64x4xbf16>
    %2 = tpu.concatenate %0, %1 in 0 : vector<448x4xbf16>, vector<64x4xbf16> -> vector<512x4xbf16>
    %3 = vector.extract_strided_slice %2 {offsets = [0, 0], sizes = [448, 4], strides = [1, 1]} : vector<512x4xbf16> to vector<448x4xbf16>
    %4 = vector.extract_strided_slice %2 {offsets = [1, 0], sizes = [448, 4], strides = [1, 1]} : vector<512x4xbf16> to vector<448x4xbf16>
    %5 = vector.extract_strided_slice %2 {offsets = [2, 0], sizes = [448, 4], strides = [1, 1]} : vector<512x4xbf16> to vector<448x4xbf16>
    %6 = vector.extract_strided_slice %2 {offsets = [24, 0], sizes = [448, 4], strides = [1, 1]} : vector<512x4xbf16> to vector<448x4xbf16>
    %7 = vector.extract_strided_slice %2 {offsets = [25, 0], sizes = [448, 4], strides = [1, 1]} : vector<512x4xbf16> to vector<448x4xbf16>
    %8 = vector.extract_strided_slice %2 {offsets = [26, 0], sizes = [448, 4], strides = [1, 1]} : vector<512x4xbf16> to vector<448x4xbf16>
    %9 = vector.extract_strided_slice %2 {offsets = [48, 0], sizes = [448, 4], strides = [1, 1]} : vector<512x4xbf16> to vector<448x4xbf16>
    %10 = vector.extract_strided_slice %2 {offsets = [49, 0], sizes = [448, 4], strides = [1, 1]} : vector<512x4xbf16> to vector<448x4xbf16>
    %11 = vector.extract_strided_slice %2 {offsets = [50, 0], sizes = [448, 4], strides = [1, 1]} : vector<512x4xbf16> to vector<448x4xbf16>
    %12 = tpu.concatenate %3, %4, %5, %6, %7, %8, %9, %10, %11 in 1 : vector<448x4xbf16>, vector<448x4xbf16>, vector<448x4xbf16>, vector<448x4xbf16>, vector<448x4xbf16>, vector<448x4xbf16>, vector<448x4xbf16>, vector<448x4xbf16>, vector<448x4xbf16> -> vector<448x36xbf16>
    %c0_3 = arith.constant 0 : index
    %c0_4 = arith.constant 0 : index
    %13 = vector.load %arg3[%c0_3, %c0_4] : memref<36x128xbf16, #tpu.memory_space<vmem>>, vector<36x128xbf16>
    %cst = arith.constant dense<0.000000e+00> : vector<448x128xf32>
    %14 = tpu.matmul %12, %13, %cst {dimension_numbers = #tpu.dot_dimension_numbers<[1], [0], [0], [1], [0, 0, 1, 1], [], []>} : vector<448x36xbf16>, vector<36x128xbf16>, vector<448x128xf32> -> vector<448x128xf32>
    %c0_5 = arith.constant 0 : index
    %c0_6 = arith.constant 0 : index
    %15 = vector.load %arg4[%c0_5, %c0_6] : memref<1x128xf32, #tpu.memory_space<vmem>>, vector<1x128xf32>
    %16 = vector.broadcast %15 : vector<1x128xf32> to vector<448x128xf32>
    %17 = arith.addf %14, %16 : vector<448x128xf32>
    %cst_7 = arith.constant 0.000000e+00 : f32
    %18 = vector.broadcast %cst_7 : f32 to vector<448x128xf32>
    %19 = arith.maximumf %17, %18 : vector<448x128xf32>
    %20 = arith.truncf %19 : vector<448x128xf32> to vector<448x128xbf16>
    %c0_8 = arith.constant 0 : index
    %c0_9 = arith.constant 0 : index
    %21 = vector.load %arg5[%c0_8, %c0_9] : memref<448x128xbf16, #tpu.memory_space<vmem>>, vector<448x128xbf16>
    tpu.vector_store %arg5[%c0_8, %c0_9], %20 {strides = array<i32>} : memref<448x128xbf16, #tpu.memory_space<vmem>>, vector<448x128xbf16>,
    return
  }
  func.func @transform_0(%arg0: i32) -> (i32, i32) {
    %c0_i32 = arith.constant 0 : i32
    %c0_i32_0 = arith.constant 0 : i32
    return %arg0, %c0_i32 : i32, i32
  }
  func.func @transform_1(%arg0: i32) -> (i32, i32) {
    %c1_i32 = arith.constant 1 : i32
    %0 = arith.addi %arg0, %c1_i32 : i32
    %c7_i32 = arith.constant 7 : i32
    %1 = arith.muli %0, %c7_i32 : i32
    %c0_i32 = arith.constant 0 : i32
    %c0_i32_0 = arith.constant 0 : i32
    return %1, %c0_i32 : i32, i32
  }
  func.func @transform_2(%arg0: i32) -> (i32, i32) {
    %c0_i32 = arith.constant 0 : i32
    %c0_i32_0 = arith.constant 0 : i32
    %c0_i32_1 = arith.constant 0 : i32
    return %c0_i32, %c0_i32_0 : i32, i32
  }
  func.func @transform_3(%arg0: i32) -> (i32, i32) {
    %c0_i32 = arith.constant 0 : i32
    %c0_i32_0 = arith.constant 0 : i32
    %c0_i32_1 = arith.constant 0 : i32
    return %c0_i32, %c0_i32_0 : i32, i32
  }
  func.func @transform_4(%arg0: i32) -> (i32, i32) {
    %c0_i32 = arith.constant 0 : i32
    %c0_i32_0 = arith.constant 0 : i32
    return %arg0, %c0_i32 : i32, i32
  }
}

</mosaic_0001>

<llo_original>
// kernel: tpu_custom_call.1
$region0: #{tpu_custom_call.1}
  #allocation0 [shape = 'u32[]', space=smem, size = 0x4, offset = 0x4, fixed_abs, tag = 'smem constant byte address 0x4 - core index']
  #allocation1 [shape = 'u32[144,128]{1,0:T(1,128)}', space=vmem, size = 0x12000, scoped, tag = 'internal scratch']
  %s0 = inlined_call_operand.vmem [shape: bf16[1344,4], index: 0, kind: input, shape index: {}]
  %s1 = inlined_call_operand.vmem [shape: bf16[1344,4], index: 1, kind: input, shape index: {}]
  %s2 = inlined_call_operand.vmem [shape: bf16[36,128], index: 2, kind: input, shape index: {}]
  %s3 = inlined_call_operand.vmem [shape: f32[1,128], index: 3, kind: input, shape index: {}]
  %s4 = inlined_call_operand.hbm [shape: bf16[896,128], index: 4, kind: output, shape index: {}]
  %s5 = sld [smem:[#allocation0]]
  $region49: #{tpu_custom_call.1} parent=0
    _
  %s7 = ssub.s32 1, %s5
  %s8 = scalar_select 0, %s7, %s5
  $region1: #{tpu_custom_call.1} parent=0
    #allocation2 [shape = 'u8[229376]{0}', space=vmem, size = 0x38000, scoped, tag = 'output window, operand 0']
    #allocation3 [shape = 's32[2]{0}', space=sflag, size = 0x8, scoped, tag = 'scoped memory for tpu_custom_call.1']
    %9 = vsyncpa [#allocation3], 0
    %s10 = scalar_lea.sflag [#allocation3], 1
    %11 = vsyncpa %s10, 0
    loop: start=0, step=1, limit=4
    $region2: #{tpu_custom_call.1} parent=1 // loop_pre_header
      _
    $region3: #{tpu_custom_call.1} parent=1 // loop_header
      %s13 = sphi 0, %s17
      %p14 = scmp.ge.s32.totalorder %s13, 4
      %s23 = sphi 0, %s25
      %s26 = sphi 0, %s23
      %s27 = sphi 0, %s26
      %s43 = sphi 0, %s27
      %s53 = sphi 0, %s55
      %s56 = sphi 0, %s53
      %s57 = sphi 0, %s56
      %s73 = sphi 0, %s57
      %s77 = sphi 0, %s77
      %s79 = sphi 0, %s77
      %s80 = sphi 0, %s79
      %s94 = sphi 0, %s80
      %s98 = sphi 0, %s98
      %s100 = sphi 0, %s98
      %s101 = sphi 0, %s100
      %s115 = sphi 0, %s101
      %s121 = sphi 0, %s123
      %s124 = sphi 0, %s121
      %s125 = sphi 0, %s124
      %s141 = sphi 0, %s125
    $region4: #{tpu_custom_call.1} parent=1 // loop_header_branch
      %16 = sbr.rel (%p14) target = $region8
    $region5: #{tpu_custom_call.1} parent=1 // loop_body
      %s18 = ssub.s32 %s13, 1
      %s19 = ssub.s32 %s13, 2
      %s20 = sadd.s32 %s13, 1
      %s21 = ssub.s32 %s13, %s20
      %p22 = scmp.eq.s32.totalorder %s21, 0
      %s24 = sadd.s32 %s23, 1
      %s25 = scalar_select %p22, %s23, %s24
      %p28 = pneg %p22
      %p29 = scmp.eq.s32.totalorder %s13, 1
      %p30 = por %p28, %p29
      %p31 = scmp.ne.s32.totalorder %s23, %s26
      %p32 = scmp.eq.s32.totalorder %s13, 0
      %p33 = por %p31, %p32
      %p34 = scmp.ne.s32.totalorder %s23, %s26
      %p35 = scmp.eq.s32.totalorder %s18, 1
      %p36 = por %p34, %p35
      %p37 = scmp.ne.s32.totalorder %s26, %s27
      %p38 = scmp.eq.s32.totalorder %s18, 0
      %p39 = por %p37, %p38
      %p40 = scmp.ne.s32.totalorder %s26, %s27
      %p41 = scmp.eq.s32.totalorder %s19, 1
      %p42 = por %p40, %p41
      %p44 = scmp.ne.s32.totalorder %s27, %s43
      %p45 = scmp.eq.s32.totalorder %s19, 0
      %p46 = por %p44, %p45
      %s47 = sadd.s32 %s13, 1
      %s48 = smul.u32 %s47, 7
      %s49 = sadd.s32 %s20, 1
      %s50 = smul.u32 %s49, 7
      %s51 = ssub.s32 %s48, %s50
      %p52 = scmp.eq.s32.totalorder %s51, 0
      %s54 = sadd.s32 %s53, 1
      %s55 = scalar_select %p52, %s53, %s54
      %p58 = pneg %p52
      %p59 = scmp.eq.s32.totalorder %s13, 1
      %p60 = por %p58, %p59
      %p61 = scmp.ne.s32.totalorder %s53, %s56
      %p62 = scmp.eq.s32.totalorder %s13, 0
      %p63 = por %p61, %p62
      %p64 = scmp.ne.s32.totalorder %s53, %s56
      %p65 = scmp.eq.s32.totalorder %s18, 1
      %p66 = por %p64, %p65
      %p67 = scmp.ne.s32.totalorder %s56, %s57
      %p68 = scmp.eq.s32.totalorder %s18, 0
      %p69 = por %p67, %p68
      %p70 = scmp.ne.s32.totalorder %s56, %s57
      %p71 = scmp.eq.s32.totalorder %s19, 1
      %p72 = por %p70, %p71
      %p74 = scmp.ne.s32.totalorder %s57, %s73
      %p75 = scmp.eq.s32.totalorder %s19, 0
      %p76 = por %p74, %p75
      %s78 = sadd.s32 %s77, 1
      %p81 = scmp.eq.s32.totalorder %s13, 1
      %p82 = scmp.ne.s32.totalorder %s77, %s79
      %p83 = scmp.eq.s32.totalorder %s13, 0
      %p84 = por %p82, %p83
      %p85 = scmp.ne.s32.totalorder %s77, %s79
      %p86 = scmp.eq.s32.totalorder %s18, 1
      %p87 = por %p85, %p86
      %p88 = scmp.ne.s32.totalorder %s79, %s80
      %p89 = scmp.eq.s32.totalorder %s18, 0
      %p90 = por %p88, %p89
      %p91 = scmp.ne.s32.totalorder %s79, %s80
      %p92 = scmp.eq.s32.totalorder %s19, 1
      %p93 = por %p91, %p92
      %p95 = scmp.ne.s32.totalorder %s80, %s94
      %p96 = scmp.eq.s32.totalorder %s19, 0
      %p97 = por %p95, %p96
      %s99 = sadd.s32 %s98, 1
      %p102 = scmp.eq.s32.totalorder %s13, 1
      %p103 = scmp.ne.s32.totalorder %s98, %s100
      %p104 = scmp.eq.s32.totalorder %s13, 0
      %p105 = por %p103, %p104
      %p106 = scmp.ne.s32.totalorder %s98, %s100
      %p107 = scmp.eq.s32.totalorder %s18, 1
      %p108 = por %p106, %p107
      %p109 = scmp.ne.s32.totalorder %s100, %s101
      %p110 = scmp.eq.s32.totalorder %s18, 0
      %p111 = por %p109, %p110
      %p112 = scmp.ne.s32.totalorder %s100, %s101
      %p113 = scmp.eq.s32.totalorder %s19, 1
      %p114 = por %p112, %p113
      %p116 = scmp.ne.s32.totalorder %s101, %s115
      %p117 = scmp.eq.s32.totalorder %s19, 0
      %p118 = por %p116, %p117
      %s119 = ssub.s32 %s13, %s20
      %p120 = scmp.eq.s32.totalorder %s119, 0
      %s122 = sadd.s32 %s121, 1
      %s123 = scalar_select %p120, %s121, %s122
      %p126 = pneg %p120
      %p127 = scmp.eq.s32.totalorder %s13, 1
      %p128 = por %p126, %p127
      %p129 = scmp.ne.s32.totalorder %s121, %s124
      %p130 = scmp.eq.s32.totalorder %s13, 0
      %p131 = por %p129, %p130
      %p132 = scmp.ne.s32.totalorder %s121, %s124
      %p133 = scmp.eq.s32.totalorder %s18, 1
      %p134 = por %p132, %p133
      %p135 = scmp.ne.s32.totalorder %s124, %s125
      %p136 = scmp.eq.s32.totalorder %s18, 0
      %p137 = por %p135, %p136
      %p138 = scmp.ne.s32.totalorder %s124, %s125
      %p139 = scmp.eq.s32.totalorder %s19, 1
      %p140 = por %p138, %p139
      %p142 = scmp.ne.s32.totalorder %s125, %s141
      %p143 = scmp.eq.s32.totalorder %s19, 0
      %p144 = por %p142, %p143
      %p145 = scmp.le.s32.totalorder 1, %s13
      %p146 = scmp.lt.s32.totalorder %s13, 3
      %p147 = pnand %p145, %p146
      %p148 = pneg %p147
      // Predicated region
      $region9: #{tpu_custom_call.1} parent=5 // pred_check
        _
      $region10: #{tpu_custom_call.1} parent=5 // pred_check_branch
        %150 = sbr.rel (%p147) target = $region12
      $region11: #{tpu_custom_call.1} parent=5 // pred_region
        %s151 = ssub.s32 %s13, 1
        // Predicated region
        $region13: #{tpu_custom_call.1} parent=11 // pred_check
          %p152 = pneg %p90
        $region14: #{tpu_custom_call.1} parent=11 // pred_check_branch
          %154 = sbr.rel (%p152) target = $region16
        $region15: #{tpu_custom_call.1} parent=11 // pred_region
          _
        $region16: #{tpu_custom_call.1} parent=11 // pred_fallthru
          _
        // Predicated region
        $region17: #{tpu_custom_call.1} parent=11 // pred_check
          %p155 = pneg %p111
        $region18: #{tpu_custom_call.1} parent=11 // pred_check_branch
          %157 = sbr.rel (%p155) target = $region20
        $region19: #{tpu_custom_call.1} parent=11 // pred_region
          _
        $region20: #{tpu_custom_call.1} parent=11 // pred_fallthru
          _
      $region12: #{tpu_custom_call.1} parent=5 // pred_fallthru
        _
      %p158 = scmp.lt.s32.totalorder %s13, 2
      // Predicated region
      $region21: #{tpu_custom_call.1} parent=5 // pred_check
        %p159 = pneg %p158
      $region22: #{tpu_custom_call.1} parent=5 // pred_check_branch
        %161 = sbr.rel (%p159) target = $region24
      $region23: #{tpu_custom_call.1} parent=5 // pred_region
        // Predicated region
        $region25: #{tpu_custom_call.1} parent=23 // pred_check
          %p162 = pneg %p33
        $region26: #{tpu_custom_call.1} parent=23 // pred_check_branch
          %164 = sbr.rel (%p162) target = $region28
        $region27: #{tpu_custom_call.1} parent=23 // pred_region
          %s165 = smul.u32 56, %s13
          %p166 = scmp.lt.s32.totalorder %s165, 167
          %s167 = scalar_select %p166, %s165, 167
          %s168 = smul.addr %s167, 4
          %s169 = scalar_lea.vmem %s0, %s168
          %s170 = smul.u32 56, %s13
        $region28: #{tpu_custom_call.1} parent=23 // pred_fallthru
          _
        // Predicated region
        $region29: #{tpu_custom_call.1} parent=23 // pred_check
          %p171 = pneg %p63
        $region30: #{tpu_custom_call.1} parent=23 // pred_check_branch
          %173 = sbr.rel (%p171) target = $region32
        $region31: #{tpu_custom_call.1} parent=23 // pred_region
          %s174 = sadd.s32 %s13, 1
          %s175 = smul.u32 %s174, 7
          %s176 = smul.u32 8, %s175
          %p177 = scmp.lt.s32.totalorder %s176, 167
          %s178 = scalar_select %p177, %s176, 167
          %s179 = smul.addr %s178, 4
          %s180 = scalar_lea.vmem %s1, %s179
          %s181 = sadd.s32 %s13, 1
          %s182 = smul.u32 %s181, 7
          %s183 = smul.u32 8, %s182
        $region32: #{tpu_custom_call.1} parent=23 // pred_fallthru
          _
      $region24: #{tpu_custom_call.1} parent=5 // pred_fallthru
        _
      %p184 = scmp.le.s32.totalorder 1, %s13
      %p185 = scmp.lt.s32.totalorder %s13, 3
      %p186 = pnand %p184, %p185
      %p187 = pneg %p186
      // Predicated region
      $region33: #{tpu_custom_call.1} parent=5 // pred_check
        _
      $region34: #{tpu_custom_call.1} parent=5 // pred_check_branch
        %189 = sbr.rel (%p186) target = $region36
      $region35: #{tpu_custom_call.1} parent=5 // pred_region
        %s190 = ssub.s32 %s13, 1
        %s191 = smul.u32 56, %s18
        %p192 = scmp.lt.s32.totalorder %s191, 167
        %s193 = scalar_select %p192, %s191, 167
        %s194 = smul.addr %s193, 4
        %s195 = scalar_lea.vmem %s0, %s194
        %p196 = pneg %p39
        %p197 = pneg %p36
        %s198 = sadd.s32 %s18, 1
        %s199 = smul.u32 %s198, 7
        %s200 = smul.u32 8, %s199
        %p201 = scmp.lt.s32.totalorder %s200, 167
        %s202 = scalar_select %p201, %s200, 167
        %s203 = smul.addr %s202, 4
        %s204 = scalar_lea.vmem %s1, %s203
        %p205 = pneg %p69
        %p206 = pneg %p66
        %p207 = pneg %p90
        %p208 = pneg %p87
        %p209 = pneg %p111
        %p210 = pneg %p108
        %p211 = pneg %p137
        %p212 = pneg %p134
        %s213 = sand.u32 %s124, 1
        %s214 = scalar_lea.sflag [#allocation3], %s213
        %s215 = sand.u32 %s124, 1
        %s216 = smul.addr %s215, 224
        %s217 = scalar_lea.vmem [#allocation2], %s216
        %s218 = smul.u32 56, %s18
        %p219 = scmp.lt.s32.totalorder %s218, 167
        %s220 = scalar_select %p219, %s218, 167
        %s221 = smul.addr %s220, 4
        %s222 = scalar_lea.vmem %s0, %s221
        %s223 = smul.u32 56, %s18
        %s224 = sadd.s32 %s18, 1
        %s225 = smul.u32 %s224, 7
        %s226 = smul.u32 8, %s225
        %p227 = scmp.lt.s32.totalorder %s226, 167
        %s228 = scalar_select %p227, %s226, 167
        %s229 = smul.addr %s228, 4
        %s230 = scalar_lea.vmem %s1, %s229
        %s231 = sadd.s32 %s18, 1
        %s232 = smul.u32 %s231, 7
        %s233 = smul.u32 8, %s232
        %s234 = smul.u32 56, %s18
        %v236 = vld [vmem:[%s222] sm:$0xf]
        %v237 = vld [vmem:[%s222 + $0x4] sm:$0xf]
        %v238 = vld [vmem:[%s222 + $0x8] sm:$0xf]
        %v239 = vld [vmem:[%s222 + $0xc] sm:$0xf]
        %v240 = vld [vmem:[%s222 + $0x10] sm:$0xf]
        %v241 = vld [vmem:[%s222 + $0x14] sm:$0xf]
        %v242 = vld [vmem:[%s222 + $0x18] sm:$0xf]
        %v243 = vld [vmem:[%s222 + $0x1c] sm:$0xf]
        %v244 = vld [vmem:[%s222 + $0x20] sm:$0xf]
        %v245 = vld [vmem:[%s222 + $0x24] sm:$0xf]
        %v246 = vld [vmem:[%s222 + $0x28] sm:$0xf]
        %v247 = vld [vmem:[%s222 + $0x2c] sm:$0xf]
        %v248 = vld [vmem:[%s222 + $0x30] sm:$0xf]
        %v249 = vld [vmem:[%s222 + $0x34] sm:$0xf]
        %v250 = vld [vmem:[%s222 + $0x38] sm:$0xf]
        %v251 = vld [vmem:[%s222 + $0x3c] sm:$0xf]
        %v252 = vld [vmem:[%s222 + $0x40] sm:$0xf]
        %v253 = vld [vmem:[%s222 + $0x44] sm:$0xf]
        %v254 = vld [vmem:[%s222 + $0x48] sm:$0xf]
        %v255 = vld [vmem:[%s222 + $0x4c] sm:$0xf]
        %v256 = vld [vmem:[%s222 + $0x50] sm:$0xf]
        %v257 = vld [vmem:[%s222 + $0x54] sm:$0xf]
        %v258 = vld [vmem:[%s222 + $0x58] sm:$0xf]
        %v259 = vld [vmem:[%s222 + $0x5c] sm:$0xf]
        %v260 = vld [vmem:[%s222 + $0x60] sm:$0xf]
        %v261 = vld [vmem:[%s222 + $0x64] sm:$0xf]
        %v262 = vld [vmem:[%s222 + $0x68] sm:$0xf]
        %v263 = vld [vmem:[%s222 + $0x6c] sm:$0xf]
        %v264 = vld [vmem:[%s222 + $0x70] sm:$0xf]
        %v265 = vld [vmem:[%s222 + $0x74] sm:$0xf]
        %v266 = vld [vmem:[%s222 + $0x78] sm:$0xf]
        %v267 = vld [vmem:[%s222 + $0x7c] sm:$0xf]
        %v268 = vld [vmem:[%s222 + $0x80] sm:$0xf]
        %v269 = vld [vmem:[%s222 + $0x84] sm:$0xf]
        %v270 = vld [vmem:[%s222 + $0x88] sm:$0xf]
        %v271 = vld [vmem:[%s222 + $0x8c] sm:$0xf]
        %v272 = vld [vmem:[%s222 + $0x90] sm:$0xf]
        %v273 = vld [vmem:[%s222 + $0x94] sm:$0xf]
        %v274 = vld [vmem:[%s222 + $0x98] sm:$0xf]
        %v275 = vld [vmem:[%s222 + $0x9c] sm:$0xf]
        %v276 = vld [vmem:[%s222 + $0xa0] sm:$0xf]
        %v277 = vld [vmem:[%s222 + $0xa4] sm:$0xf]
        %v278 = vld [vmem:[%s222 + $0xa8] sm:$0xf]
        %v279 = vld [vmem:[%s222 + $0xac] sm:$0xf]
        %v280 = vld [vmem:[%s222 + $0xb0] sm:$0xf]
        %v281 = vld [vmem:[%s222 + $0xb4] sm:$0xf]
        %v282 = vld [vmem:[%s222 + $0xb8] sm:$0xf]
        %v283 = vld [vmem:[%s222 + $0xbc] sm:$0xf]
        %v284 = vld [vmem:[%s222 + $0xc0] sm:$0xf]
        %v285 = vld [vmem:[%s222 + $0xc4] sm:$0xf]
        %v286 = vld [vmem:[%s222 + $0xc8] sm:$0xf]
        %v287 = vld [vmem:[%s222 + $0xcc] sm:$0xf]
        %v288 = vld [vmem:[%s222 + $0xd0] sm:$0xf]
        %v289 = vld [vmem:[%s222 + $0xd4] sm:$0xf]
        %v290 = vld [vmem:[%s222 + $0xd8] sm:$0xf]
        %v291 = vld [vmem:[%s222 + $0xdc] sm:$0xf]
        %v292 = vld [vmem:[%s230] sm:$0xf]
        %v293 = vld [vmem:[%s230 + $0x4] sm:$0xf]
        %v294 = vld [vmem:[%s230 + $0x8] sm:$0xf]
        %v295 = vld [vmem:[%s230 + $0xc] sm:$0xf]
        %v296 = vld [vmem:[%s230 + $0x10] sm:$0xf]
        %v297 = vld [vmem:[%s230 + $0x14] sm:$0xf]
        %v298 = vld [vmem:[%s230 + $0x18] sm:$0xf]
        %v299 = vld [vmem:[%s230 + $0x1c] sm:$0xf]
        %v356 = vunpack.c.l.b16 %v236
        %v357 = vunpack.c.l.b16 %v237
        %v358 = vunpack.c.l.b16 %v238
        %v359 = vunpack.c.l.b16 %v239
        %v360 = vunpack.c.l.b16 %v240
        %v361 = vunpack.c.l.b16 %v241
        %v362 = vunpack.c.l.b16 %v242
        %v363 = vunpack.c.l.b16 %v243
        %v364 = vunpack.c.l.b16 %v244
        %v365 = vunpack.c.l.b16 %v245
        %v366 = vunpack.c.l.b16 %v246
        %v367 = vunpack.c.l.b16 %v247
        %v368 = vunpack.c.l.b16 %v248
        %v369 = vunpack.c.l.b16 %v249
        %v370 = vunpack.c.l.b16 %v250
        %v371 = vunpack.c.l.b16 %v251
        %v372 = vunpack.c.l.b16 %v252
        %v373 = vunpack.c.l.b16 %v253
        %v374 = vunpack.c.l.b16 %v254
        %v375 = vunpack.c.l.b16 %v255
        %v376 = vunpack.c.l.b16 %v256
        %v377 = vunpack.c.l.b16 %v257
        %v378 = vunpack.c.l.b16 %v258
        %v379 = vunpack.c.l.b16 %v259
        %v380 = vunpack.c.l.b16 %v260
        %v381 = vunpack.c.l.b16 %v261
        %v382 = vunpack.c.l.b16 %v262
        %v383 = vunpack.c.l.b16 %v263
        %v384 = vunpack.c.l.b16 %v264
        %v385 = vunpack.c.l.b16 %v265
        %v386 = vunpack.c.l.b16 %v266
        %v387 = vunpack.c.l.b16 %v267
        %v388 = vunpack.c.l.b16 %v268
        %v389 = vunpack.c.l.b16 %v269
        %v390 = vunpack.c.l.b16 %v270
        %v391 = vunpack.c.l.b16 %v271
        %v392 = vunpack.c.l.b16 %v272
        %v393 = vunpack.c.l.b16 %v273
        %v394 = vunpack.c.l.b16 %v274
        %v395 = vunpack.c.l.b16 %v275
        %v396 = vunpack.c.l.b16 %v276
        %v397 = vunpack.c.l.b16 %v277
        %v398 = vunpack.c.l.b16 %v278
        %v399 = vunpack.c.l.b16 %v279
        %v400 = vunpack.c.l.b16 %v280
        %v401 = vunpack.c.l.b16 %v281
        %v402 = vunpack.c.l.b16 %v282
        %v403 = vunpack.c.l.b16 %v283
        %v404 = vunpack.c.l.b16 %v284
        %v405 = vunpack.c.l.b16 %v285
        %v406 = vunpack.c.l.b16 %v286
        %v407 = vunpack.c.l.b16 %v287
        %v408 = vunpack.c.l.b16 %v288
        %v409 = vunpack.c.l.b16 %v289
        %v410 = vunpack.c.l.b16 %v290
        %v411 = vunpack.c.l.b16 %v291
        %v412 = vpack.c.b16 %v357, %v356
        %v413 = vpack.c.b16 %v359, %v358
        %v414 = vpack.c.b16 %v361, %v360
        %v415 = vpack.c.b16 %v363, %v362
        %v416 = vpack.c.b16 %v365, %v364
        %v417 = vpack.c.b16 %v367, %v366
        %v418 = vpack.c.b16 %v369, %v368
        %v419 = vpack.c.b16 %v371, %v370
        %v420 = vpack.c.b16 %v373, %v372
        %v421 = vpack.c.b16 %v375, %v374
        %v422 = vpack.c.b16 %v377, %v376
        %v423 = vpack.c.b16 %v379, %v378
        %v424 = vpack.c.b16 %v381, %v380
        %v425 = vpack.c.b16 %v383, %v382
        %v426 = vpack.c.b16 %v385, %v384
        %v427 = vpack.c.b16 %v387, %v386
        %v428 = vpack.c.b16 %v389, %v388
        %v429 = vpack.c.b16 %v391, %v390
        %v430 = vpack.c.b16 %v393, %v392
        %v431 = vpack.c.b16 %v395, %v394
        %v432 = vpack.c.b16 %v397, %v396
        %v433 = vpack.c.b16 %v399, %v398
        %v434 = vpack.c.b16 %v401, %v400
        %v435 = vpack.c.b16 %v403, %v402
        %v436 = vpack.c.b16 %v405, %v404
        %v437 = vpack.c.b16 %v407, %v406
        %v438 = vpack.c.b16 %v409, %v408
        %v439 = vpack.c.b16 %v411, %v410
        %v448 = vunpack.c.l.b16 %v292
        %v449 = vunpack.c.l.b16 %v293
        %v450 = vunpack.c.l.b16 %v294
        %v451 = vunpack.c.l.b16 %v295
        %v452 = vunpack.c.l.b16 %v296
        %v453 = vunpack.c.l.b16 %v297
        %v454 = vunpack.c.l.b16 %v298
        %v455 = vunpack.c.l.b16 %v299
        %v456 = vpack.c.b16 %v449, %v448
        %v457 = vpack.c.b16 %v451, %v450
        %v458 = vpack.c.b16 %v453, %v452
        %v459 = vpack.c.b16 %v455, %v454
        %vm460 = vsmask.f32 7424
        %v462 = vshrl.u32 %v412, 16
        %v464 = vshll.u32 %v412, 16
        %v466 = vrot.slane %v464, 1
        %v467 = vor.u32 %v462, %v466
        %v469 = vshll.u32 %v413, 16
        %v471 = vrot.slane %v469, 1
        %v472 = vsel %vm460, %v467, %v471
        %v473 = vshrl.u32 %v413, 16
        %v475 = vor.u32 %v473, %v471
        %v477 = vshll.u32 %v414, 16
        %v479 = vrot.slane %v477, 1
        %v480 = vsel %vm460, %v475, %v479
        %v481 = vshrl.u32 %v414, 16
        %v483 = vor.u32 %v481, %v479
        %v485 = vshll.u32 %v415, 16
        %v487 = vrot.slane %v485, 1
        %v488 = vsel %vm460, %v483, %v487
        %v489 = vshrl.u32 %v415, 16
        %v491 = vor.u32 %v489, %v487
        %v493 = vshll.u32 %v416, 16
        %v495 = vrot.slane %v493, 1
        %v496 = vsel %vm460, %v491, %v495
        %v497 = vshrl.u32 %v416, 16
        %v499 = vor.u32 %v497, %v495
        %v501 = vshll.u32 %v417, 16
        %v503 = vrot.slane %v501, 1
        %v504 = vsel %vm460, %v499, %v503
        %v505 = vshrl.u32 %v417, 16
        %v507 = vor.u32 %v505, %v503
        %v509 = vshll.u32 %v418, 16
        %v511 = vrot.slane %v509, 1
        %v512 = vsel %vm460, %v507, %v511
        %v513 = vshrl.u32 %v418, 16
        %v515 = vor.u32 %v513, %v511
        %v517 = vshll.u32 %v419, 16
        %v519 = vrot.slane %v517, 1
        %v520 = vsel %vm460, %v515, %v519
        %v521 = vshrl.u32 %v419, 16
        %v523 = vor.u32 %v521, %v519
        %v525 = vshll.u32 %v420, 16
        %v527 = vrot.slane %v525, 1
        %v528 = vsel %vm460, %v523, %v527
        %v529 = vshrl.u32 %v420, 16
        %v531 = vor.u32 %v529, %v527
        %v533 = vshll.u32 %v421, 16
        %v535 = vrot.slane %v533, 1
        %v536 = vsel %vm460, %v531, %v535
        %v537 = vshrl.u32 %v421, 16
        %v539 = vor.u32 %v537, %v535
        %v541 = vshll.u32 %v422, 16
        %v543 = vrot.slane %v541, 1
        %v544 = vsel %vm460, %v539, %v543
        %v545 = vshrl.u32 %v422, 16
        %v547 = vor.u32 %v545, %v543
        %v549 = vshll.u32 %v423, 16
        %v551 = vrot.slane %v549, 1
        %v552 = vsel %vm460, %v547, %v551
        %v553 = vshrl.u32 %v423, 16
        %v555 = vor.u32 %v553, %v551
        %v557 = vshll.u32 %v424, 16
        %v559 = vrot.slane %v557, 1
        %v560 = vsel %vm460, %v555, %v559
        %v561 = vshrl.u32 %v424, 16
        %v563 = vor.u32 %v561, %v559
        %v565 = vshll.u32 %v425, 16
        %v567 = vrot.slane %v565, 1
        %v568 = vsel %vm460, %v563, %v567
        %v569 = vshrl.u32 %v425, 16
        %v571 = vor.u32 %v569, %v567
        %v573 = vshll.u32 %v426, 16
        %v575 = vrot.slane %v573, 1
        %v576 = vsel %vm460, %v571, %v575
        %v577 = vshrl.u32 %v426, 16
        %v579 = vor.u32 %v577, %v575
        %v581 = vshll.u32 %v427, 16
        %v583 = vrot.slane %v581, 1
        %v584 = vsel %vm460, %v579, %v583
        %v585 = vshrl.u32 %v427, 16
        %v587 = vor.u32 %v585, %v583
        %v589 = vshll.u32 %v428, 16
        %v591 = vrot.slane %v589, 1
        %v592 = vsel %vm460, %v587, %v591
        %v593 = vshrl.u32 %v428, 16
        %v595 = vor.u32 %v593, %v591
        %v597 = vshll.u32 %v429, 16
        %v599 = vrot.slane %v597, 1
        %v600 = vsel %vm460, %v595, %v599
        %v601 = vshrl.u32 %v429, 16
        %v603 = vor.u32 %v601, %v599
        %v605 = vshll.u32 %v430, 16
        %v607 = vrot.slane %v605, 1
        %v608 = vsel %vm460, %v603, %v607
        %v609 = vshrl.u32 %v430, 16
        %v611 = vor.u32 %v609, %v607
        %v613 = vshll.u32 %v431, 16
        %v615 = vrot.slane %v613, 1
        %v616 = vsel %vm460, %v611, %v615
        %v617 = vshrl.u32 %v431, 16
        %v619 = vor.u32 %v617, %v615
        %v621 = vshll.u32 %v432, 16
        %v623 = vrot.slane %v621, 1
        %v624 = vsel %vm460, %v619, %v623
        %v625 = vshrl.u32 %v432, 16
        %v627 = vor.u32 %v625, %v623
        %v629 = vshll.u32 %v433, 16
        %v631 = vrot.slane %v629, 1
        %v632 = vsel %vm460, %v627, %v631
        %v633 = vshrl.u32 %v433, 16
        %v635 = vor.u32 %v633, %v631
        %v637 = vshll.u32 %v434, 16
        %v639 = vrot.slane %v637, 1
        %v640 = vsel %vm460, %v635, %v639
        %v641 = vshrl.u32 %v434, 16
        %v643 = vor.u32 %v641, %v639
        %v645 = vshll.u32 %v435, 16
        %v647 = vrot.slane %v645, 1
        %v648 = vsel %vm460, %v643, %v647
        %v649 = vshrl.u32 %v435, 16
        %v651 = vor.u32 %v649, %v647
        %v653 = vshll.u32 %v436, 16
        %v655 = vrot.slane %v653, 1
        %v656 = vsel %vm460, %v651, %v655
        %v657 = vshrl.u32 %v436, 16
        %v659 = vor.u32 %v657, %v655
        %v661 = vshll.u32 %v437, 16
        %v663 = vrot.slane %v661, 1
        %v664 = vsel %vm460, %v659, %v663
        %v665 = vshrl.u32 %v437, 16
        %v667 = vor.u32 %v665, %v663
        %v669 = vshll.u32 %v438, 16
        %v671 = vrot.slane %v669, 1
        %v672 = vsel %vm460, %v667, %v671
        %v673 = vshrl.u32 %v438, 16
        %v675 = vor.u32 %v673, %v671
        %v677 = vshll.u32 %v439, 16
        %v679 = vrot.slane %v677, 1
        %v680 = vsel %vm460, %v675, %v679
        %v681 = vshrl.u32 %v439, 16
        %v683 = vor.u32 %v681, %v679
        %v685 = vshll.u32 %v456, 16
        %v687 = vrot.slane %v685, 1
        %v688 = vsel %vm460, %v683, %v687
        %689 = vrot.lane.b32.xlu0 %v472, 4
        %v690 = vpop.permute.xlu0 %689
        %691 = vrot.lane.b32.xlu0 %v480, 4
        %v692 = vpop.permute.xlu0 %691
        %693 = vrot.lane.b32.xlu0 %v488, 4
        %v694 = vpop.permute.xlu0 %693
        %695 = vrot.lane.b32.xlu0 %v496, 4
        %v696 = vpop.permute.xlu0 %695
        %697 = vrot.lane.b32.xlu0 %v504, 4
        %v698 = vpop.permute.xlu0 %697
        %699 = vrot.lane.b32.xlu0 %v512, 4
        %v700 = vpop.permute.xlu0 %699
        %701 = vrot.lane.b32.xlu0 %v520, 4
        %v702 = vpop.permute.xlu0 %701
        %703 = vrot.lane.b32.xlu0 %v528, 4
        %v704 = vpop.permute.xlu0 %703
        %705 = vrot.lane.b32.xlu0 %v536, 4
        %v706 = vpop.permute.xlu0 %705
        %707 = vrot.lane.b32.xlu0 %v544, 4
        %v708 = vpop.permute.xlu0 %707
        %709 = vrot.lane.b32.xlu0 %v552, 4
        %v710 = vpop.permute.xlu0 %709
        %711 = vrot.lane.b32.xlu0 %v560, 4
        %v712 = vpop.permute.xlu0 %711
        %713 = vrot.lane.b32.xlu0 %v568, 4
        %v714 = vpop.permute.xlu0 %713
        %715 = vrot.lane.b32.xlu0 %v576, 4
        %v716 = vpop.permute.xlu0 %715
        %717 = vrot.lane.b32.xlu0 %v584, 4
        %v718 = vpop.permute.xlu0 %717
        %719 = vrot.lane.b32.xlu0 %v592, 4
        %v720 = vpop.permute.xlu0 %719
        %721 = vrot.lane.b32.xlu0 %v600, 4
        %v722 = vpop.permute.xlu0 %721
        %723 = vrot.lane.b32.xlu0 %v608, 4
        %v724 = vpop.permute.xlu0 %723
        %725 = vrot.lane.b32.xlu0 %v616, 4
        %v726 = vpop.permute.xlu0 %725
        %727 = vrot.lane.b32.xlu0 %v624, 4
        %v728 = vpop.permute.xlu0 %727
        %729 = vrot.lane.b32.xlu0 %v632, 4
        %v730 = vpop.permute.xlu0 %729
        %731 = vrot.lane.b32.xlu0 %v640, 4
        %v732 = vpop.permute.xlu0 %731
        %733 = vrot.lane.b32.xlu0 %v648, 4
        %v734 = vpop.permute.xlu0 %733
        %735 = vrot.lane.b32.xlu0 %v656, 4
        %v736 = vpop.permute.xlu0 %735
        %737 = vrot.lane.b32.xlu0 %v664, 4
        %v738 = vpop.permute.xlu0 %737
        %739 = vrot.lane.b32.xlu0 %v672, 4
        %v740 = vpop.permute.xlu0 %739
        %741 = vrot.lane.b32.xlu0 %v680, 4
        %v742 = vpop.permute.xlu0 %741
        %743 = vrot.lane.b32.xlu0 %v688, 4
        %v744 = vpop.permute.xlu0 %743
        %vm745 = vcmask 1046528
        %v746 = vrot.slane %v412, 1
        %v747 = vrot.slane %v413, 1
        %v748 = vsel %vm745, %v746, %v747
        %v749 = vrot.slane %v414, 1
        %v750 = vsel %vm745, %v747, %v749
        %v751 = vrot.slane %v415, 1
        %v752 = vsel %vm745, %v749, %v751
        %v753 = vrot.slane %v416, 1
        %v754 = vsel %vm745, %v751, %v753
        %v755 = vrot.slane %v417, 1
        %v756 = vsel %vm745, %v753, %v755
        %v757 = vrot.slane %v418, 1
        %v758 = vsel %vm745, %v755, %v757
        %v759 = vrot.slane %v419, 1
        %v760 = vsel %vm745, %v757, %v759
        %v761 = vrot.slane %v420, 1
        %v762 = vsel %vm745, %v759, %v761
        %v763 = vrot.slane %v421, 1
        %v764 = vsel %vm745, %v761, %v763
        %v765 = vrot.slane %v422, 1
        %v766 = vsel %vm745, %v763, %v765
        %v767 = vrot.slane %v423, 1
        %v768 = vsel %vm745, %v765, %v767
        %v769 = vrot.slane %v424, 1
        %v770 = vsel %vm745, %v767, %v769
        %v771 = vrot.slane %v425, 1
        %v772 = vsel %vm745, %v769, %v771
        %v773 = vrot.slane %v426, 1
        %v774 = vsel %vm745, %v771, %v773
        %v775 = vrot.slane %v427, 1
        %v776 = vsel %vm745, %v773, %v775
        %v777 = vrot.slane %v428, 1
        %v778 = vsel %vm745, %v775, %v777
        %v779 = vrot.slane %v429, 1
        %v780 = vsel %vm745, %v777, %v779
        %v781 = vrot.slane %v430, 1
        %v782 = vsel %vm745, %v779, %v781
        %v783 = vrot.slane %v431, 1
        %v784 = vsel %vm745, %v781, %v783
        %v785 = vrot.slane %v432, 1
        %v786 = vsel %vm745, %v783, %v785
        %v787 = vrot.slane %v433, 1
        %v788 = vsel %vm745, %v785, %v787
        %v789 = vrot.slane %v434, 1
        %v790 = vsel %vm745, %v787, %v789
        %v791 = vrot.slane %v435, 1
        %v792 = vsel %vm745, %v789, %v791
        %v793 = vrot.slane %v436, 1
        %v794 = vsel %vm745, %v791, %v793
        %v795 = vrot.slane %v437, 1
        %v796 = vsel %vm745, %v793, %v795
        %v797 = vrot.slane %v438, 1
        %v798 = vsel %vm745, %v795, %v797
        %v799 = vrot.slane %v439, 1
        %v800 = vsel %vm745, %v797, %v799
        %v801 = vrot.slane %v456, 1
        %v802 = vsel %vm745, %v799, %v801
        %803 = vrot.lane.b32.xlu0 %v748, 8
        %v804 = vpop.permute.xlu0 %803
        %805 = vrot.lane.b32.xlu0 %v750, 8
        %v806 = vpop.permute.xlu0 %805
        %807 = vrot.lane.b32.xlu0 %v752, 8
        %v808 = vpop.permute.xlu0 %807
        %809 = vrot.lane.b32.xlu0 %v754, 8
        %v810 = vpop.permute.xlu0 %809
        %811 = vrot.lane.b32.xlu0 %v756, 8
        %v812 = vpop.permute.xlu0 %811
        %813 = vrot.lane.b32.xlu0 %v758, 8
        %v814 = vpop.permute.xlu0 %813
        %815 = vrot.lane.b32.xlu0 %v760, 8
        %v816 = vpop.permute.xlu0 %815
        %817 = vrot.lane.b32.xlu0 %v762, 8
        %v818 = vpop.permute.xlu0 %817
        %819 = vrot.lane.b32.xlu0 %v764, 8
        %v820 = vpop.permute.xlu0 %819
        %821 = vrot.lane.b32.xlu0 %v766, 8
        %v822 = vpop.permute.xlu0 %821
        %823 = vrot.lane.b32.xlu0 %v768, 8
        %v824 = vpop.permute.xlu0 %823
        %825 = vrot.lane.b32.xlu0 %v770, 8
        %v826 = vpop.permute.xlu0 %825
        %827 = vrot.lane.b32.xlu0 %v772, 8
        %v828 = vpop.permute.xlu0 %827
        %829 = vrot.lane.b32.xlu0 %v774, 8
        %v830 = vpop.permute.xlu0 %829
        %831 = vrot.lane.b32.xlu0 %v776, 8
        %v832 = vpop.permute.xlu0 %831
        %833 = vrot.lane.b32.xlu0 %v778, 8
        %v834 = vpop.permute.xlu0 %833
        %835 = vrot.lane.b32.xlu0 %v780, 8
        %v836 = vpop.permute.xlu0 %835
        %837 = vrot.lane.b32.xlu0 %v782, 8
        %v838 = vpop.permute.xlu0 %837
        %839 = vrot.lane.b32.xlu0 %v784, 8
        %v840 = vpop.permute.xlu0 %839
        %841 = vrot.lane.b32.xlu0 %v786, 8
        %v842 = vpop.permute.xlu0 %841
        %843 = vrot.lane.b32.xlu0 %v788, 8
        %v844 = vpop.permute.xlu0 %843
        %845 = vrot.lane.b32.xlu0 %v790, 8
        %v846 = vpop.permute.xlu0 %845
        %847 = vrot.lane.b32.xlu0 %v792, 8
        %v848 = vpop.permute.xlu0 %847
        %849 = vrot.lane.b32.xlu0 %v794, 8
        %v850 = vpop.permute.xlu0 %849
        %851 = vrot.lane.b32.xlu0 %v796, 8
        %v852 = vpop.permute.xlu0 %851
        %853 = vrot.lane.b32.xlu0 %v798, 8
        %v854 = vpop.permute.xlu0 %853
        %855 = vrot.lane.b32.xlu0 %v800, 8
        %v856 = vpop.permute.xlu0 %855
        %857 = vrot.lane.b32.xlu0 %v802, 8
        %v858 = vpop.permute.xlu0 %857
        %vm859 = vcmask 1043456
        %v860 = vrot.slane %v413, 4
        %v861 = vrot.slane %v414, 4
        %v862 = vsel %vm859, %v860, %v861
        %v863 = vrot.slane %v415, 4
        %v864 = vsel %vm859, %v861, %v863
        %v865 = vrot.slane %v416, 4
        %v866 = vsel %vm859, %v863, %v865
        %v867 = vrot.slane %v417, 4
        %v868 = vsel %vm859, %v865, %v867
        %v869 = vrot.slane %v418, 4
        %v870 = vsel %vm859, %v867, %v869
        %v871 = vrot.slane %v419, 4
        %v872 = vsel %vm859, %v869, %v871
        %v873 = vrot.slane %v420, 4
        %v874 = vsel %vm859, %v871, %v873
        %v875 = vrot.slane %v421, 4
        %v876 = vsel %vm859, %v873, %v875
        %v877 = vrot.slane %v422, 4
        %v878 = vsel %vm859, %v875, %v877
        %v879 = vrot.slane %v423, 4
        %v880 = vsel %vm859, %v877, %v879
        %v881 = vrot.slane %v424, 4
        %v882 = vsel %vm859, %v879, %v881
        %v883 = vrot.slane %v425, 4
        %v884 = vsel %vm859, %v881, %v883
        %v885 = vrot.slane %v426, 4
        %v886 = vsel %vm859, %v883, %v885
        %v887 = vrot.slane %v427, 4
        %v888 = vsel %vm859, %v885, %v887
        %v889 = vrot.slane %v428, 4
        %v890 = vsel %vm859, %v887, %v889
        %v891 = vrot.slane %v429, 4
        %v892 = vsel %vm859, %v889, %v891
        %v893 = vrot.slane %v430, 4
        %v894 = vsel %vm859, %v891, %v893
        %v895 = vrot.slane %v431, 4
        %v896 = vsel %vm859, %v893, %v895
        %v897 = vrot.slane %v432, 4
        %v898 = vsel %vm859, %v895, %v897
        %v899 = vrot.slane %v433, 4
        %v900 = vsel %vm859, %v897, %v899
        %v901 = vrot.slane %v434, 4
        %v902 = vsel %vm859, %v899, %v901
        %v903 = vrot.slane %v435, 4
        %v904 = vsel %vm859, %v901, %v903
        %v905 = vrot.slane %v436, 4
        %v906 = vsel %vm859, %v903, %v905
        %v907 = vrot.slane %v437, 4
        %v908 = vsel %vm859, %v905, %v907
        %v909 = vrot.slane %v438, 4
        %v910 = vsel %vm859, %v907, %v909
        %v911 = vrot.slane %v439, 4
        %v912 = vsel %vm859, %v909, %v911
        %v913 = vrot.slane %v456, 4
        %v914 = vsel %vm859, %v911, %v913
        %v915 = vrot.slane %v457, 4
        %v916 = vsel %vm859, %v913, %v915
        %917 = vrot.lane.b32.xlu0 %v862, 12
        %v918 = vpop.permute.xlu0 %917
        %919 = vrot.lane.b32.xlu0 %v864, 12
        %v920 = vpop.permute.xlu0 %919
        %921 = vrot.lane.b32.xlu0 %v866, 12
        %v922 = vpop.permute.xlu0 %921
        %923 = vrot.lane.b32.xlu0 %v868, 12
        %v924 = vpop.permute.xlu0 %923
        %925 = vrot.lane.b32.xlu0 %v870, 12
        %v926 = vpop.permute.xlu0 %925
        %927 = vrot.lane.b32.xlu0 %v872, 12
        %v928 = vpop.permute.xlu0 %927
        %929 = vrot.lane.b32.xlu0 %v874, 12
        %v930 = vpop.permute.xlu0 %929
        %931 = vrot.lane.b32.xlu0 %v876, 12
        %v932 = vpop.permute.xlu0 %931
        %933 = vrot.lane.b32.xlu0 %v878, 12
        %v934 = vpop.permute.xlu0 %933
        %935 = vrot.lane.b32.xlu0 %v880, 12
        %v936 = vpop.permute.xlu0 %935
        %937 = vrot.lane.b32.xlu0 %v882, 12
        %v938 = vpop.permute.xlu0 %937
        %939 = vrot.lane.b32.xlu0 %v884, 12
        %v940 = vpop.permute.xlu0 %939
        %941 = vrot.lane.b32.xlu0 %v886, 12
        %v942 = vpop.permute.xlu0 %941
        %943 = vrot.lane.b32.xlu0 %v888, 12
        %v944 = vpop.permute.xlu0 %943
        %945 = vrot.lane.b32.xlu0 %v890, 12
        %v946 = vpop.permute.xlu0 %945
        %947 = vrot.lane.b32.xlu0 %v892, 12
        %v948 = vpop.permute.xlu0 %947
        %949 = vrot.lane.b32.xlu0 %v894, 12
        %v950 = vpop.permute.xlu0 %949
        %951 = vrot.lane.b32.xlu0 %v896, 12
        %v952 = vpop.permute.xlu0 %951
        %953 = vrot.lane.b32.xlu0 %v898, 12
        %v954 = vpop.permute.xlu0 %953
        %955 = vrot.lane.b32.xlu0 %v900, 12
        %v956 = vpop.permute.xlu0 %955
        %957 = vrot.lane.b32.xlu0 %v902, 12
        %v958 = vpop.permute.xlu0 %957
        %959 = vrot.lane.b32.xlu0 %v904, 12
        %v960 = vpop.permute.xlu0 %959
        %961 = vrot.lane.b32.xlu0 %v906, 12
        %v962 = vpop.permute.xlu0 %961
        %963 = vrot.lane.b32.xlu0 %v908, 12
        %v964 = vpop.permute.xlu0 %963
        %965 = vrot.lane.b32.xlu0 %v910, 12
        %v966 = vpop.permute.xlu0 %965
        %967 = vrot.lane.b32.xlu0 %v912, 12
        %v968 = vpop.permute.xlu0 %967
        %969 = vrot.lane.b32.xlu0 %v914, 12
        %v970 = vpop.permute.xlu0 %969
        %971 = vrot.lane.b32.xlu0 %v916, 12
        %v972 = vpop.permute.xlu0 %971
        %vm973 = vsmask.f32 3328
        %v974 = vrot.slane %v473, 4
        %v975 = vrot.slane %v469, 5
        %v976 = vor.u32 %v974, %v975
        %v977 = vrot.slane %v481, 4
        %v978 = vrot.slane %v477, 5
        %v979 = vor.u32 %v977, %v978
        %v980 = vsel %vm973, %v976, %v979
        %v981 = vrot.slane %v489, 4
        %v982 = vrot.slane %v485, 5
        %v983 = vor.u32 %v981, %v982
        %v984 = vsel %vm973, %v979, %v983
        %v985 = vrot.slane %v497, 4
        %v986 = vrot.slane %v493, 5
        %v987 = vor.u32 %v985, %v986
        %v988 = vsel %vm973, %v983, %v987
        %v989 = vrot.slane %v505, 4
        %v990 = vrot.slane %v501, 5
        %v991 = vor.u32 %v989, %v990
        %v992 = vsel %vm973, %v987, %v991
        %v993 = vrot.slane %v513, 4
        %v994 = vrot.slane %v509, 5
        %v995 = vor.u32 %v993, %v994
        %v996 = vsel %vm973, %v991, %v995
        %v997 = vrot.slane %v521, 4
        %v998 = vrot.slane %v517, 5
        %v999 = vor.u32 %v997, %v998
        %v1000 = vsel %vm973, %v995, %v999
        %v1001 = vrot.slane %v529, 4
        %v1002 = vrot.slane %v525, 5
        %v1003 = vor.u32 %v1001, %v1002
        %v1004 = vsel %vm973, %v999, %v1003
        %v1005 = vrot.slane %v537, 4
        %v1006 = vrot.slane %v533, 5
        %v1007 = vor.u32 %v1005, %v1006
        %v1008 = vsel %vm973, %v1003, %v1007
        %v1009 = vrot.slane %v545, 4
        %v1010 = vrot.slane %v541, 5
        %v1011 = vor.u32 %v1009, %v1010
        %v1012 = vsel %vm973, %v1007, %v1011
        %v1013 = vrot.slane %v553, 4
        %v1014 = vrot.slane %v549, 5
        %v1015 = vor.u32 %v1013, %v1014
        %v1016 = vsel %vm973, %v1011, %v1015
        %v1017 = vrot.slane %v561, 4
        %v1018 = vrot.slane %v557, 5
        %v1019 = vor.u32 %v1017, %v1018
        %v1020 = vsel %vm973, %v1015, %v1019
        %v1021 = vrot.slane %v569, 4
        %v1022 = vrot.slane %v565, 5
        %v1023 = vor.u32 %v1021, %v1022
        %v1024 = vsel %vm973, %v1019, %v1023
        %v1025 = vrot.slane %v577, 4
        %v1026 = vrot.slane %v573, 5
        %v1027 = vor.u32 %v1025, %v1026
        %v1028 = vsel %vm973, %v1023, %v1027
        %v1029 = vrot.slane %v585, 4
        %v1030 = vrot.slane %v581, 5
        %v1031 = vor.u32 %v1029, %v1030
        %v1032 = vsel %vm973, %v1027, %v1031
        %v1033 = vrot.slane %v593, 4
        %v1034 = vrot.slane %v589, 5
        %v1035 = vor.u32 %v1033, %v1034
        %v1036 = vsel %vm973, %v1031, %v1035
        %v1037 = vrot.slane %v601, 4
        %v1038 = vrot.slane %v597, 5
        %v1039 = vor.u32 %v1037, %v1038
        %v1040 = vsel %vm973, %v1035, %v1039
        %v1041 = vrot.slane %v609, 4
        %v1042 = vrot.slane %v605, 5
        %v1043 = vor.u32 %v1041, %v1042
        %v1044 = vsel %vm973, %v1039, %v1043
        %v1045 = vrot.slane %v617, 4
        %v1046 = vrot.slane %v613, 5
        %v1047 = vor.u32 %v1045, %v1046
        %v1048 = vsel %vm973, %v1043, %v1047
        %v1049 = vrot.slane %v625, 4
        %v1050 = vrot.slane %v621, 5
        %v1051 = vor.u32 %v1049, %v1050
        %v1052 = vsel %vm973, %v1047, %v1051
        %v1053 = vrot.slane %v633, 4
        %v1054 = vrot.slane %v629, 5
        %v1055 = vor.u32 %v1053, %v1054
        %v1056 = vsel %vm973, %v1051, %v1055
        %v1057 = vrot.slane %v641, 4
        %v1058 = vrot.slane %v637, 5
        %v1059 = vor.u32 %v1057, %v1058
        %v1060 = vsel %vm973, %v1055, %v1059
        %v1061 = vrot.slane %v649, 4
        %v1062 = vrot.slane %v645, 5
        %v1063 = vor.u32 %v1061, %v1062
        %v1064 = vsel %vm973, %v1059, %v1063
        %v1065 = vrot.slane %v657, 4
        %v1066 = vrot.slane %v653, 5
        %v1067 = vor.u32 %v1065, %v1066
        %v1068 = vsel %vm973, %v1063, %v1067
        %v1069 = vrot.slane %v665, 4
        %v1070 = vrot.slane %v661, 5
        %v1071 = vor.u32 %v1069, %v1070
        %v1072 = vsel %vm973, %v1067, %v1071
        %v1073 = vrot.slane %v673, 4
        %v1074 = vrot.slane %v669, 5
        %v1075 = vor.u32 %v1073, %v1074
        %v1076 = vsel %vm973, %v1071, %v1075
        %v1077 = vrot.slane %v681, 4
        %v1078 = vrot.slane %v677, 5
        %v1079 = vor.u32 %v1077, %v1078
        %v1080 = vsel %vm973, %v1075, %v1079
        %v1081 = vshrl.u32 %v456, 16
        %v1083 = vrot.slane %v1081, 4
        %v1084 = vrot.slane %v685, 5
        %v1085 = vor.u32 %v1083, %v1084
        %v1086 = vsel %vm973, %v1079, %v1085
        %v1088 = vshrl.u32 %v457, 16
        %v1090 = vrot.slane %v1088, 4
        %v1091 = vshll.u32 %v457, 16
        %v1093 = vrot.slane %v1091, 5
        %v1094 = vor.u32 %v1090, %v1093
        %v1095 = vsel %vm973, %v1085, %v1094
        %1096 = vrot.lane.b32.xlu0 %v980, 16
        %v1097 = vpop.permute.xlu0 %1096
        %1098 = vrot.lane.b32.xlu0 %v984, 16
        %v1099 = vpop.permute.xlu0 %1098
        %1100 = vrot.lane.b32.xlu0 %v988, 16
        %v1101 = vpop.permute.xlu0 %1100
        %1102 = vrot.lane.b32.xlu0 %v992, 16
        %v1103 = vpop.permute.xlu0 %1102
        %1104 = vrot.lane.b32.xlu0 %v996, 16
        %v1105 = vpop.permute.xlu0 %1104
        %1106 = vrot.lane.b32.xlu0 %v1000, 16
        %v1107 = vpop.permute.xlu0 %1106
        %1108 = vrot.lane.b32.xlu0 %v1004, 16
        %v1109 = vpop.permute.xlu0 %1108
        %1110 = vrot.lane.b32.xlu0 %v1008, 16
        %v1111 = vpop.permute.xlu0 %1110
        %1112 = vrot.lane.b32.xlu0 %v1012, 16
        %v1113 = vpop.permute.xlu0 %1112
        %1114 = vrot.lane.b32.xlu0 %v1016, 16
        %v1115 = vpop.permute.xlu0 %1114
        %1116 = vrot.lane.b32.xlu0 %v1020, 16
        %v1117 = vpop.permute.xlu0 %1116
        %1118 = vrot.lane.b32.xlu0 %v1024, 16
        %v1119 = vpop.permute.xlu0 %1118
        %1120 = vrot.lane.b32.xlu0 %v1028, 16
        %v1121 = vpop.permute.xlu0 %1120
        %1122 = vrot.lane.b32.xlu0 %v1032, 16
        %v1123 = vpop.permute.xlu0 %1122
        %1124 = vrot.lane.b32.xlu0 %v1036, 16
        %v1125 = vpop.permute.xlu0 %1124
        %1126 = vrot.lane.b32.xlu0 %v1040, 16
        %v1127 = vpop.permute.xlu0 %1126
        %1128 = vrot.lane.b32.xlu0 %v1044, 16
        %v1129 = vpop.permute.xlu0 %1128
        %1130 = vrot.lane.b32.xlu0 %v1048, 16
        %v1131 = vpop.permute.xlu0 %1130
        %1132 = vrot.lane.b32.xlu0 %v1052, 16
        %v1133 = vpop.permute.xlu0 %1132
        %1134 = vrot.lane.b32.xlu0 %v1056, 16
        %v1135 = vpop.permute.xlu0 %1134
        %1136 = vrot.lane.b32.xlu0 %v1060, 16
        %v1137 = vpop.permute.xlu0 %1136
        %1138 = vrot.lane.b32.xlu0 %v1064, 16
        %v1139 = vpop.permute.xlu0 %1138
        %1140 = vrot.lane.b32.xlu0 %v1068, 16
        %v1141 = vpop.permute.xlu0 %1140
        %1142 = vrot.lane.b32.xlu0 %v1072, 16
        %v1143 = vpop.permute.xlu0 %1142
        %1144 = vrot.lane.b32.xlu0 %v1076, 16
        %v1145 = vpop.permute.xlu0 %1144
        %1146 = vrot.lane.b32.xlu0 %v1080, 16
        %v1147 = vpop.permute.xlu0 %1146
        %1148 = vrot.lane.b32.xlu0 %v1086, 16
        %v1149 = vpop.permute.xlu0 %1148
        %1150 = vrot.lane.b32.xlu0 %v1095, 16
        %v1151 = vpop.permute.xlu0 %1150
        %vm1152 = vcmask 1042432
        %v1153 = vrot.slane %v413, 5
        %v1154 = vrot.slane %v414, 5
        %v1155 = vsel %vm1152, %v1153, %v1154
        %v1156 = vrot.slane %v415, 5
        %v1157 = vsel %vm1152, %v1154, %v1156
        %v1158 = vrot.slane %v416, 5
        %v1159 = vsel %vm1152, %v1156, %v1158
        %v1160 = vrot.slane %v417, 5
        %v1161 = vsel %vm1152, %v1158, %v1160
        %v1162 = vrot.slane %v418, 5
        %v1163 = vsel %vm1152, %v1160, %v1162
        %v1164 = vrot.slane %v419, 5
        %v1165 = vsel %vm1152, %v1162, %v1164
        %v1166 = vrot.slane %v420, 5
        %v1167 = vsel %vm1152, %v1164, %v1166
        %v1168 = vrot.slane %v421, 5
        %v1169 = vsel %vm1152, %v1166, %v1168
        %v1170 = vrot.slane %v422, 5
        %v1171 = vsel %vm1152, %v1168, %v1170
        %v1172 = vrot.slane %v423, 5
        %v1173 = vsel %vm1152, %v1170, %v1172
        %v1174 = vrot.slane %v424, 5
        %v1175 = vsel %vm1152, %v1172, %v1174
        %v1176 = vrot.slane %v425, 5
        %v1177 = vsel %vm1152, %v1174, %v1176
        %v1178 = vrot.slane %v426, 5
        %v1179 = vsel %vm1152, %v1176, %v1178
        %v1180 = vrot.slane %v427, 5
        %v1181 = vsel %vm1152, %v1178, %v1180
        %v1182 = vrot.slane %v428, 5
        %v1183 = vsel %vm1152, %v1180, %v1182
        %v1184 = vrot.slane %v429, 5
        %v1185 = vsel %vm1152, %v1182, %v1184
        %v1186 = vrot.slane %v430, 5
        %v1187 = vsel %vm1152, %v1184, %v1186
        %v1188 = vrot.slane %v431, 5
        %v1189 = vsel %vm1152, %v1186, %v1188
        %v1190 = vrot.slane %v432, 5
        %v1191 = vsel %vm1152, %v1188, %v1190
        %v1192 = vrot.slane %v433, 5
        %v1193 = vsel %vm1152, %v1190, %v1192
        %v1194 = vrot.slane %v434, 5
        %v1195 = vsel %vm1152, %v1192, %v1194
        %v1196 = vrot.slane %v435, 5
        %v1197 = vsel %vm1152, %v1194, %v1196
        %v1198 = vrot.slane %v436, 5
        %v1199 = vsel %vm1152, %v1196, %v1198
        %v1200 = vrot.slane %v437, 5
        %v1201 = vsel %vm1152, %v1198, %v1200
        %v1202 = vrot.slane %v438, 5
        %v1203 = vsel %vm1152, %v1200, %v1202
        %v1204 = vrot.slane %v439, 5
        %v1205 = vsel %vm1152, %v1202, %v1204
        %v1206 = vrot.slane %v456, 5
        %v1207 = vsel %vm1152, %v1204, %v1206
        %v1208 = vrot.slane %v457, 5
        %v1209 = vsel %vm1152, %v1206, %v1208
        %1210 = vrot.lane.b32.xlu0 %v1155, 20
        %v1211 = vpop.permute.xlu0 %1210
        %1212 = vrot.lane.b32.xlu0 %v1157, 20
        %v1213 = vpop.permute.xlu0 %1212
        %1214 = vrot.lane.b32.xlu0 %v1159, 20
        %v1215 = vpop.permute.xlu0 %1214
        %1216 = vrot.lane.b32.xlu0 %v1161, 20
        %v1217 = vpop.permute.xlu0 %1216
        %1218 = vrot.lane.b32.xlu0 %v1163, 20
        %v1219 = vpop.permute.xlu0 %1218
        %1220 = vrot.lane.b32.xlu0 %v1165, 20
        %v1221 = vpop.permute.xlu0 %1220
        %1222 = vrot.lane.b32.xlu0 %v1167, 20
        %v1223 = vpop.permute.xlu0 %1222
        %1224 = vrot.lane.b32.xlu0 %v1169, 20
        %v1225 = vpop.permute.xlu0 %1224
        %1226 = vrot.lane.b32.xlu0 %v1171, 20
        %v1227 = vpop.permute.xlu0 %1226
        %1228 = vrot.lane.b32.xlu0 %v1173, 20
        %v1229 = vpop.permute.xlu0 %1228
        %1230 = vrot.lane.b32.xlu0 %v1175, 20
        %v1231 = vpop.permute.xlu0 %1230
        %1232 = vrot.lane.b32.xlu0 %v1177, 20
        %v1233 = vpop.permute.xlu0 %1232
        %1234 = vrot.lane.b32.xlu0 %v1179, 20
        %v1235 = vpop.permute.xlu0 %1234
        %1236 = vrot.lane.b32.xlu0 %v1181, 20
        %v1237 = vpop.permute.xlu0 %1236
        %1238 = vrot.lane.b32.xlu0 %v1183, 20
        %v1239 = vpop.permute.xlu0 %1238
        %1240 = vrot.lane.b32.xlu0 %v1185, 20
        %v1241 = vpop.permute.xlu0 %1240
        %1242 = vrot.lane.b32.xlu0 %v1187, 20
        %v1243 = vpop.permute.xlu0 %1242
        %1244 = vrot.lane.b32.xlu0 %v1189, 20
        %v1245 = vpop.permute.xlu0 %1244
        %1246 = vrot.lane.b32.xlu0 %v1191, 20
        %v1247 = vpop.permute.xlu0 %1246
        %1248 = vrot.lane.b32.xlu0 %v1193, 20
        %v1249 = vpop.permute.xlu0 %1248
        %1250 = vrot.lane.b32.xlu0 %v1195, 20
        %v1251 = vpop.permute.xlu0 %1250
        %1252 = vrot.lane.b32.xlu0 %v1197, 20
        %v1253 = vpop.permute.xlu0 %1252
        %1254 = vrot.lane.b32.xlu0 %v1199, 20
        %v1255 = vpop.permute.xlu0 %1254
        %1256 = vrot.lane.b32.xlu0 %v1201, 20
        %v1257 = vpop.permute.xlu0 %1256
        %1258 = vrot.lane.b32.xlu0 %v1203, 20
        %v1259 = vpop.permute.xlu0 %1258
        %1260 = vrot.lane.b32.xlu0 %v1205, 20
        %v1261 = vpop.permute.xlu0 %1260
        %1262 = vrot.lane.b32.xlu0 %v1207, 20
        %v1263 = vpop.permute.xlu0 %1262
        %1264 = vrot.lane.b32.xlu0 %v1209, 20
        %v1265 = vpop.permute.xlu0 %1264
        %1266 = vrot.lane.b32.xlu0 %v415, 24
        %v1267 = vpop.permute.xlu0 %1266
        %1268 = vrot.lane.b32.xlu0 %v416, 24
        %v1269 = vpop.permute.xlu0 %1268
        %1270 = vrot.lane.b32.xlu0 %v417, 24
        %v1271 = vpop.permute.xlu0 %1270
        %1272 = vrot.lane.b32.xlu0 %v418, 24
        %v1273 = vpop.permute.xlu0 %1272
        %1274 = vrot.lane.b32.xlu0 %v419, 24
        %v1275 = vpop.permute.xlu0 %1274
        %1276 = vrot.lane.b32.xlu0 %v420, 24
        %v1277 = vpop.permute.xlu0 %1276
        %1278 = vrot.lane.b32.xlu0 %v421, 24
        %v1279 = vpop.permute.xlu0 %1278
        %1280 = vrot.lane.b32.xlu0 %v422, 24
        %v1281 = vpop.permute.xlu0 %1280
        %1282 = vrot.lane.b32.xlu0 %v423, 24
        %v1283 = vpop.permute.xlu0 %1282
        %1284 = vrot.lane.b32.xlu0 %v424, 24
        %v1285 = vpop.permute.xlu0 %1284
        %1286 = vrot.lane.b32.xlu0 %v425, 24
        %v1287 = vpop.permute.xlu0 %1286
        %1288 = vrot.lane.b32.xlu0 %v426, 24
        %v1289 = vpop.permute.xlu0 %1288
        %1290 = vrot.lane.b32.xlu0 %v427, 24
        %v1291 = vpop.permute.xlu0 %1290
        %1292 = vrot.lane.b32.xlu0 %v428, 24
        %v1293 = vpop.permute.xlu0 %1292
        %1294 = vrot.lane.b32.xlu0 %v429, 24
        %v1295 = vpop.permute.xlu0 %1294
        %1296 = vrot.lane.b32.xlu0 %v430, 24
        %v1297 = vpop.permute.xlu0 %1296
        %1298 = vrot.lane.b32.xlu0 %v431, 24
        %v1299 = vpop.permute.xlu0 %1298
        %1300 = vrot.lane.b32.xlu0 %v432, 24
        %v1301 = vpop.permute.xlu0 %1300
        %1302 = vrot.lane.b32.xlu0 %v433, 24
        %v1303 = vpop.permute.xlu0 %1302
        %1304 = vrot.lane.b32.xlu0 %v434, 24
        %v1305 = vpop.permute.xlu0 %1304
        %1306 = vrot.lane.b32.xlu0 %v435, 24
        %v1307 = vpop.permute.xlu0 %1306
        %1308 = vrot.lane.b32.xlu0 %v436, 24
        %v1309 = vpop.permute.xlu0 %1308
        %1310 = vrot.lane.b32.xlu0 %v437, 24
        %v1311 = vpop.permute.xlu0 %1310
        %1312 = vrot.lane.b32.xlu0 %v438, 24
        %v1313 = vpop.permute.xlu0 %1312
        %1314 = vrot.lane.b32.xlu0 %v439, 24
        %v1315 = vpop.permute.xlu0 %1314
        %1316 = vrot.lane.b32.xlu0 %v456, 24
        %v1317 = vpop.permute.xlu0 %1316
        %1318 = vrot.lane.b32.xlu0 %v457, 24
        %v1319 = vpop.permute.xlu0 %1318
        %1320 = vrot.lane.b32.xlu0 %v458, 24
        %v1321 = vpop.permute.xlu0 %1320
        %v1322 = vor.u32 %v1081, %v687
        %v1323 = vrot.slane %v1091, 1
        %v1324 = vsel %vm460, %v1322, %v1323
        %v1325 = vor.u32 %v1088, %v1323
        %v1327 = vshll.u32 %v458, 16
        %v1329 = vrot.slane %v1327, 1
        %v1330 = vsel %vm460, %v1325, %v1329
        %v1331 = vshrl.u32 %v458, 16
        %v1333 = vor.u32 %v1331, %v1329
        %v1335 = vshll.u32 %v459, 16
        %v1337 = vrot.slane %v1335, 1
        %v1338 = vsel %vm460, %v1333, %v1337
        %1339 = vrot.lane.b32.xlu0 %v496, 28
        %v1340 = vpop.permute.xlu0 %1339
        %1341 = vrot.lane.b32.xlu0 %v504, 28
        %v1342 = vpop.permute.xlu0 %1341
        %1343 = vrot.lane.b32.xlu0 %v512, 28
        %v1344 = vpop.permute.xlu0 %1343
        %1345 = vrot.lane.b32.xlu0 %v520, 28
        %v1346 = vpop.permute.xlu0 %1345
        %1347 = vrot.lane.b32.xlu0 %v528, 28
        %v1348 = vpop.permute.xlu0 %1347
        %1349 = vrot.lane.b32.xlu0 %v536, 28
        %v1350 = vpop.permute.xlu0 %1349
        %1351 = vrot.lane.b32.xlu0 %v544, 28
        %v1352 = vpop.permute.xlu0 %1351
        %1353 = vrot.lane.b32.xlu0 %v552, 28
        %v1354 = vpop.permute.xlu0 %1353
        %1355 = vrot.lane.b32.xlu0 %v560, 28
        %v1356 = vpop.permute.xlu0 %1355
        %1357 = vrot.lane.b32.xlu0 %v568, 28
        %v1358 = vpop.permute.xlu0 %1357
        %1359 = vrot.lane.b32.xlu0 %v576, 28
        %v1360 = vpop.permute.xlu0 %1359
        %1361 = vrot.lane.b32.xlu0 %v584, 28
        %v1362 = vpop.permute.xlu0 %1361
        %1363 = vrot.lane.b32.xlu0 %v592, 28
        %v1364 = vpop.permute.xlu0 %1363
        %1365 = vrot.lane.b32.xlu0 %v600, 28
        %v1366 = vpop.permute.xlu0 %1365
        %1367 = vrot.lane.b32.xlu0 %v608, 28
        %v1368 = vpop.permute.xlu0 %1367
        %1369 = vrot.lane.b32.xlu0 %v616, 28
        %v1370 = vpop.permute.xlu0 %1369
        %1371 = vrot.lane.b32.xlu0 %v624, 28
        %v1372 = vpop.permute.xlu0 %1371
        %1373 = vrot.lane.b32.xlu0 %v632, 28
        %v1374 = vpop.permute.xlu0 %1373
        %1375 = vrot.lane.b32.xlu0 %v640, 28
        %v1376 = vpop.permute.xlu0 %1375
        %1377 = vrot.lane.b32.xlu0 %v648, 28
        %v1378 = vpop.permute.xlu0 %1377
        %1379 = vrot.lane.b32.xlu0 %v656, 28
        %v1380 = vpop.permute.xlu0 %1379
        %1381 = vrot.lane.b32.xlu0 %v664, 28
        %v1382 = vpop.permute.xlu0 %1381
        %1383 = vrot.lane.b32.xlu0 %v672, 28
        %v1384 = vpop.permute.xlu0 %1383
        %1385 = vrot.lane.b32.xlu0 %v680, 28
        %v1386 = vpop.permute.xlu0 %1385
        %1387 = vrot.lane.b32.xlu0 %v688, 28
        %v1388 = vpop.permute.xlu0 %1387
        %1389 = vrot.lane.b32.xlu0 %v1324, 28
        %v1390 = vpop.permute.xlu0 %1389
        %1391 = vrot.lane.b32.xlu0 %v1330, 28
        %v1392 = vpop.permute.xlu0 %1391
        %1393 = vrot.lane.b32.xlu0 %v1338, 28
        %v1394 = vpop.permute.xlu0 %1393
        %v1395 = vrot.slane %v457, 1
        %v1396 = vsel %vm745, %v801, %v1395
        %v1397 = vrot.slane %v458, 1
        %v1398 = vsel %vm745, %v1395, %v1397
        %v1399 = vrot.slane %v459, 1
        %v1400 = vsel %vm745, %v1397, %v1399
        %1401 = vrot.lane.b32.xlu0 %v754, 32
        %v1402 = vpop.permute.xlu0 %1401
        %1403 = vrot.lane.b32.xlu0 %v756, 32
        %v1404 = vpop.permute.xlu0 %1403
        %1405 = vrot.lane.b32.xlu0 %v758, 32
        %v1406 = vpop.permute.xlu0 %1405
        %1407 = vrot.lane.b32.xlu0 %v760, 32
        %v1408 = vpop.permute.xlu0 %1407
        %1409 = vrot.lane.b32.xlu0 %v762, 32
        %v1410 = vpop.permute.xlu0 %1409
        %1411 = vrot.lane.b32.xlu0 %v764, 32
        %v1412 = vpop.permute.xlu0 %1411
        %1413 = vrot.lane.b32.xlu0 %v766, 32
        %v1414 = vpop.permute.xlu0 %1413
        %1415 = vrot.lane.b32.xlu0 %v768, 32
        %v1416 = vpop.permute.xlu0 %1415
        %1417 = vrot.lane.b32.xlu0 %v770, 32
        %v1418 = vpop.permute.xlu0 %1417
        %1419 = vrot.lane.b32.xlu0 %v772, 32
        %v1420 = vpop.permute.xlu0 %1419
        %1421 = vrot.lane.b32.xlu0 %v774, 32
        %v1422 = vpop.permute.xlu0 %1421
        %1423 = vrot.lane.b32.xlu0 %v776, 32
        %v1424 = vpop.permute.xlu0 %1423
        %1425 = vrot.lane.b32.xlu0 %v778, 32
        %v1426 = vpop.permute.xlu0 %1425
        %1427 = vrot.lane.b32.xlu0 %v780, 32
        %v1428 = vpop.permute.xlu0 %1427
        %1429 = vrot.lane.b32.xlu0 %v782, 32
        %v1430 = vpop.permute.xlu0 %1429
        %1431 = vrot.lane.b32.xlu0 %v784, 32
        %v1432 = vpop.permute.xlu0 %1431
        %1433 = vrot.lane.b32.xlu0 %v786, 32
        %v1434 = vpop.permute.xlu0 %1433
        %1435 = vrot.lane.b32.xlu0 %v788, 32
        %v1436 = vpop.permute.xlu0 %1435
        %1437 = vrot.lane.b32.xlu0 %v790, 32
        %v1438 = vpop.permute.xlu0 %1437
        %1439 = vrot.lane.b32.xlu0 %v792, 32
        %v1440 = vpop.permute.xlu0 %1439
        %1441 = vrot.lane.b32.xlu0 %v794, 32
        %v1442 = vpop.permute.xlu0 %1441
        %1443 = vrot.lane.b32.xlu0 %v796, 32
        %v1444 = vpop.permute.xlu0 %1443
        %1445 = vrot.lane.b32.xlu0 %v798, 32
        %v1446 = vpop.permute.xlu0 %1445
        %1447 = vrot.lane.b32.xlu0 %v800, 32
        %v1448 = vpop.permute.xlu0 %1447
        %1449 = vrot.lane.b32.xlu0 %v802, 32
        %v1450 = vpop.permute.xlu0 %1449
        %1451 = vrot.lane.b32.xlu0 %v1396, 32
        %v1452 = vpop.permute.xlu0 %1451
        %1453 = vrot.lane.b32.xlu0 %v1398, 32
        %v1454 = vpop.permute.xlu0 %1453
        %1455 = vrot.lane.b32.xlu0 %v1400, 32
        %v1456 = vpop.permute.xlu0 %1455
        %vm1457 = vcmask 31744
        %v1459 = vsel %vm1457, %v412, %v690
        %v1461 = vsel %vm1457, %v413, %v692
        %v1463 = vsel %vm1457, %v414, %v694
        %v1465 = vsel %vm1457, %v415, %v696
        %v1467 = vsel %vm1457, %v416, %v698
        %v1469 = vsel %vm1457, %v417, %v700
        %v1471 = vsel %vm1457, %v418, %v702
        %v1473 = vsel %vm1457, %v419, %v704
        %v1475 = vsel %vm1457, %v420, %v706
        %v1477 = vsel %vm1457, %v421, %v708
        %v1479 = vsel %vm1457, %v422, %v710
        %v1481 = vsel %vm1457, %v423, %v712
        %v1483 = vsel %vm1457, %v424, %v714
        %v1485 = vsel %vm1457, %v425, %v716
        %v1487 = vsel %vm1457, %v426, %v718
        %v1489 = vsel %vm1457, %v427, %v720
        %v1491 = vsel %vm1457, %v428, %v722
        %v1493 = vsel %vm1457, %v429, %v724
        %v1495 = vsel %vm1457, %v430, %v726
        %v1497 = vsel %vm1457, %v431, %v728
        %v1499 = vsel %vm1457, %v432, %v730
        %v1501 = vsel %vm1457, %v433, %v732
        %v1503 = vsel %vm1457, %v434, %v734
        %v1505 = vsel %vm1457, %v435, %v736
        %v1507 = vsel %vm1457, %v436, %v738
        %v1509 = vsel %vm1457, %v437, %v740
        %v1511 = vsel %vm1457, %v438, %v742
        %v1513 = vsel %vm1457, %v439, %v744
        %vm1514 = vcmask 64512
        %v1516 = vsel %vm1514, %v1459, %v804
        %v1518 = vsel %vm1514, %v1461, %v806
        %v1520 = vsel %vm1514, %v1463, %v808
        %v1522 = vsel %vm1514, %v1465, %v810
        %v1524 = vsel %vm1514, %v1467, %v812
        %v1526 = vsel %vm1514, %v1469, %v814
        %v1528 = vsel %vm1514, %v1471, %v816
        %v1530 = vsel %vm1514, %v1473, %v818
        %v1532 = vsel %vm1514, %v1475, %v820
        %v1534 = vsel %vm1514, %v1477, %v822
        %v1536 = vsel %vm1514, %v1479, %v824
        %v1538 = vsel %vm1514, %v1481, %v826
        %v1540 = vsel %vm1514, %v1483, %v828
        %v1542 = vsel %vm1514, %v1485, %v830
        %v1544 = vsel %vm1514, %v1487, %v832
        %v1546 = vsel %vm1514, %v1489, %v834
        %v1548 = vsel %vm1514, %v1491, %v836
        %v1550 = vsel %vm1514, %v1493, %v838
        %v1552 = vsel %vm1514, %v1495, %v840
        %v1554 = vsel %vm1514, %v1497, %v842
        %v1556 = vsel %vm1514, %v1499, %v844
        %v1558 = vsel %vm1514, %v1501, %v846
        %v1560 = vsel %vm1514, %v1503, %v848
        %v1562 = vsel %vm1514, %v1505, %v850
        %v1564 = vsel %vm1514, %v1507, %v852
        %v1566 = vsel %vm1514, %v1509, %v854
        %v1568 = vsel %vm1514, %v1511, %v856
        %v1570 = vsel %vm1514, %v1513, %v858
        %vm1571 = vcmask 97280
        %v1573 = vsel %vm1571, %v1516, %v918
        %v1575 = vsel %vm1571, %v1518, %v920
        %v1577 = vsel %vm1571, %v1520, %v922
        %v1579 = vsel %vm1571, %v1522, %v924
        %v1581 = vsel %vm1571, %v1524, %v926
        %v1583 = vsel %vm1571, %v1526, %v928
        %v1585 = vsel %vm1571, %v1528, %v930
        %v1587 = vsel %vm1571, %v1530, %v932
        %v1589 = vsel %vm1571, %v1532, %v934
        %v1591 = vsel %vm1571, %v1534, %v936
        %v1593 = vsel %vm1571, %v1536, %v938
        %v1595 = vsel %vm1571, %v1538, %v940
        %v1597 = vsel %vm1571, %v1540, %v942
        %v1599 = vsel %vm1571, %v1542, %v944
        %v1601 = vsel %vm1571, %v1544, %v946
        %v1603 = vsel %vm1571, %v1546, %v948
        %v1605 = vsel %vm1571, %v1548, %v950
        %v1607 = vsel %vm1571, %v1550, %v952
        %v1609 = vsel %vm1571, %v1552, %v954
        %v1611 = vsel %vm1571, %v1554, %v956
        %v1613 = vsel %vm1571, %v1556, %v958
        %v1615 = vsel %vm1571, %v1558, %v960
        %v1617 = vsel %vm1571, %v1560, %v962
        %v1619 = vsel %vm1571, %v1562, %v964
        %v1621 = vsel %vm1571, %v1564, %v966
        %v1623 = vsel %vm1571, %v1566, %v968
        %v1625 = vsel %vm1571, %v1568, %v970
        %v1627 = vsel %vm1571, %v1570, %v972
        %vm1628 = vcmask 130048
        %v1630 = vsel %vm1628, %v1573, %v1097
        %v1632 = vsel %vm1628, %v1575, %v1099
        %v1634 = vsel %vm1628, %v1577, %v1101
        %v1636 = vsel %vm1628, %v1579, %v1103
        %v1638 = vsel %vm1628, %v1581, %v1105
        %v1640 = vsel %vm1628, %v1583, %v1107
        %v1642 = vsel %vm1628, %v1585, %v1109
        %v1644 = vsel %vm1628, %v1587, %v1111
        %v1646 = vsel %vm1628, %v1589, %v1113
        %v1648 = vsel %vm1628, %v1591, %v1115
        %v1650 = vsel %vm1628, %v1593, %v1117
        %v1652 = vsel %vm1628, %v1595, %v1119
        %v1654 = vsel %vm1628, %v1597, %v1121
        %v1656 = vsel %vm1628, %v1599, %v1123
        %v1658 = vsel %vm1628, %v1601, %v1125
        %v1660 = vsel %vm1628, %v1603, %v1127
        %v1662 = vsel %vm1628, %v1605, %v1129
        %v1664 = vsel %vm1628, %v1607, %v1131
        %v1666 = vsel %vm1628, %v1609, %v1133
        %v1668 = vsel %vm1628, %v1611, %v1135
        %v1670 = vsel %vm1628, %v1613, %v1137
        %v1672 = vsel %vm1628, %v1615, %v1139
        %v1674 = vsel %vm1628, %v1617, %v1141
        %v1676 = vsel %vm1628, %v1619, %v1143
        %v1678 = vsel %vm1628, %v1621, %v1145
        %v1680 = vsel %vm1628, %v1623, %v1147
        %v1682 = vsel %vm1628, %v1625, %v1149
        %v1684 = vsel %vm1628, %v1627, %v1151
        %vm1685 = vcmask 162816
        %v1687 = vsel %vm1685, %v1630, %v1211
        %v1689 = vsel %vm1685, %v1632, %v1213
        %v1691 = vsel %vm1685, %v1634, %v1215
        %v1693 = vsel %vm1685, %v1636, %v1217
        %v1695 = vsel %vm1685, %v1638, %v1219
        %v1697 = vsel %vm1685, %v1640, %v1221
        %v1699 = vsel %vm1685, %v1642, %v1223
        %v1701 = vsel %vm1685, %v1644, %v1225
        %v1703 = vsel %vm1685, %v1646, %v1227
        %v1705 = vsel %vm1685, %v1648, %v1229
        %v1707 = vsel %vm1685, %v1650, %v1231
        %v1709 = vsel %vm1685, %v1652, %v1233
        %v1711 = vsel %vm1685, %v1654, %v1235
        %v1713 = vsel %vm1685, %v1656, %v1237
        %v1715 = vsel %vm1685, %v1658, %v1239
        %v1717 = vsel %vm1685, %v1660, %v1241
        %v1719 = vsel %vm1685, %v1662, %v1243
        %v1721 = vsel %vm1685, %v1664, %v1245
        %v1723 = vsel %vm1685, %v1666, %v1247
        %v1725 = vsel %vm1685, %v1668, %v1249
        %v1727 = vsel %vm1685, %v1670, %v1251
        %v1729 = vsel %vm1685, %v1672, %v1253
        %v1731 = vsel %vm1685, %v1674, %v1255
        %v1733 = vsel %vm1685, %v1676, %v1257
        %v1735 = vsel %vm1685, %v1678, %v1259
        %v1737 = vsel %vm1685, %v1680, %v1261
        %v1739 = vsel %vm1685, %v1682, %v1263
        %v1741 = vsel %vm1685, %v1684, %v1265
        %vm1742 = vcmask 195584
        %v1744 = vsel %vm1742, %v1687, %v1267
        %v1746 = vsel %vm1742, %v1689, %v1269
        %v1748 = vsel %vm1742, %v1691, %v1271
        %v1750 = vsel %vm1742, %v1693, %v1273
        %v1752 = vsel %vm1742, %v1695, %v1275
        %v1754 = vsel %vm1742, %v1697, %v1277
        %v1756 = vsel %vm1742, %v1699, %v1279
        %v1758 = vsel %vm1742, %v1701, %v1281
        %v1760 = vsel %vm1742, %v1703, %v1283
        %v1762 = vsel %vm1742, %v1705, %v1285
        %v1764 = vsel %vm1742, %v1707, %v1287
        %v1766 = vsel %vm1742, %v1709, %v1289
        %v1768 = vsel %vm1742, %v1711, %v1291
        %v1770 = vsel %vm1742, %v1713, %v1293
        %v1772 = vsel %vm1742, %v1715, %v1295
        %v1774 = vsel %vm1742, %v1717, %v1297
        %v1776 = vsel %vm1742, %v1719, %v1299
        %v1778 = vsel %vm1742, %v1721, %v1301
        %v1780 = vsel %vm1742, %v1723, %v1303
        %v1782 = vsel %vm1742, %v1725, %v1305
        %v1784 = vsel %vm1742, %v1727, %v1307
        %v1786 = vsel %vm1742, %v1729, %v1309
        %v1788 = vsel %vm1742, %v1731, %v1311
        %v1790 = vsel %vm1742, %v1733, %v1313
        %v1792 = vsel %vm1742, %v1735, %v1315
        %v1794 = vsel %vm1742, %v1737, %v1317
        %v1796 = vsel %vm1742, %v1739, %v1319
        %v1798 = vsel %vm1742, %v1741, %v1321
        %vm1799 = vcmask 228352
        %v1801 = vsel %vm1799, %v1744, %v1340
        %v1803 = vsel %vm1799, %v1746, %v1342
        %v1805 = vsel %vm1799, %v1748, %v1344
        %v1807 = vsel %vm1799, %v1750, %v1346
        %v1809 = vsel %vm1799, %v1752, %v1348
        %v1811 = vsel %vm1799, %v1754, %v1350
        %v1813 = vsel %vm1799, %v1756, %v1352
        %v1815 = vsel %vm1799, %v1758, %v1354
        %v1817 = vsel %vm1799, %v1760, %v1356
        %v1819 = vsel %vm1799, %v1762, %v1358
        %v1821 = vsel %vm1799, %v1764, %v1360
        %v1823 = vsel %vm1799, %v1766, %v1362
        %v1825 = vsel %vm1799, %v1768, %v1364
        %v1827 = vsel %vm1799, %v1770, %v1366
        %v1829 = vsel %vm1799, %v1772, %v1368
        %v1831 = vsel %vm1799, %v1774, %v1370
        %v1833 = vsel %vm1799, %v1776, %v1372
        %v1835 = vsel %vm1799, %v1778, %v1374
        %v1837 = vsel %vm1799, %v1780, %v1376
        %v1839 = vsel %vm1799, %v1782, %v1378
        %v1841 = vsel %vm1799, %v1784, %v1380
        %v1843 = vsel %vm1799, %v1786, %v1382
        %v1845 = vsel %vm1799, %v1788, %v1384
        %v1847 = vsel %vm1799, %v1790, %v1386
        %v1849 = vsel %vm1799, %v1792, %v1388
        %v1851 = vsel %vm1799, %v1794, %v1390
        %v1853 = vsel %vm1799, %v1796, %v1392
        %v1855 = vsel %vm1799, %v1798, %v1394
        %vm1856 = vcmask 261120
        %v1858 = vsel %vm1856, %v1801, %v1402
        %v1860 = vsel %vm1856, %v1803, %v1404
        %v1862 = vsel %vm1856, %v1805, %v1406
        %v1864 = vsel %vm1856, %v1807, %v1408
        %v1866 = vsel %vm1856, %v1809, %v1410
        %v1868 = vsel %vm1856, %v1811, %v1412
        %v1870 = vsel %vm1856, %v1813, %v1414
        %v1872 = vsel %vm1856, %v1815, %v1416
        %v1874 = vsel %vm1856, %v1817, %v1418
        %v1876 = vsel %vm1856, %v1819, %v1420
        %v1878 = vsel %vm1856, %v1821, %v1422
        %v1880 = vsel %vm1856, %v1823, %v1424
        %v1882 = vsel %vm1856, %v1825, %v1426
        %v1884 = vsel %vm1856, %v1827, %v1428
        %v1886 = vsel %vm1856, %v1829, %v1430
        %v1888 = vsel %vm1856, %v1831, %v1432
        %v1890 = vsel %vm1856, %v1833, %v1434
        %v1892 = vsel %vm1856, %v1835, %v1436
        %v1894 = vsel %vm1856, %v1837, %v1438
        %v1896 = vsel %vm1856, %v1839, %v1440
        %v1898 = vsel %vm1856, %v1841, %v1442
        %v1900 = vsel %vm1856, %v1843, %v1444
        %v1902 = vsel %vm1856, %v1845, %v1446
        %v1904 = vsel %vm1856, %v1847, %v1448
        %v1906 = vsel %vm1856, %v1849, %v1450
        %v1908 = vsel %vm1856, %v1851, %v1452
        %v1910 = vsel %vm1856, %v1853, %v1454
        %v1912 = vsel %vm1856, %v1855, %v1456
        %v1913 = vld [vmem:[%s2] sm:$0xf]
        %v1914 = vld [vmem:[%s2 + $0x4] sm:$0xf]
        %v1915 = vld [vmem:[%s2 + $0x8] sm:$0xf]
        %v1916 = vld [vmem:[%s2 + $0xc] sm:$0xf]
        %v1917 = vld [vmem:[%s2 + $0x10] sm:$0x3]
        %v1918 = vld [vmem:[%s3] sm:$0x1]
        %v1920 = vlaneseq
        %v1921 = vshrl.u32 %v1920, 7
        %v1922 = vsub.s32 0, %v1921
        %v1923 = vrot.slane %v1918, %v1922
        %v1930 = vunpack.c.l.b16 %v1913
        %v1931 = vunpack.c.l.b16 %v1914
        %v1932 = vunpack.c.l.b16 %v1915
        %v1933 = vunpack.c.l.b16 %v1916
        %v1934 = vunpack.c.l.b16 %v1917
        %v1935 = vpack.c.b16 %v1931, %v1930
        %v1936 = vpack.c.b16 %v1933, %v1932
        %v1937 = vpack.c.b16 %v1934, %v1934
        %vm1940 = vcmask 293888
        %v1941 = vsel %vm1940, %v1858, 0
        %v1943 = vsel %vm1940, %v1860, 0
        %v1945 = vsel %vm1940, %v1862, 0
        %v1947 = vsel %vm1940, %v1864, 0
        %v1949 = vsel %vm1940, %v1866, 0
        %v1951 = vsel %vm1940, %v1868, 0
        %v1953 = vsel %vm1940, %v1870, 0
        %v1955 = vsel %vm1940, %v1872, 0
        %v1957 = vsel %vm1940, %v1874, 0
        %v1959 = vsel %vm1940, %v1876, 0
        %v1961 = vsel %vm1940, %v1878, 0
        %v1963 = vsel %vm1940, %v1880, 0
        %v1965 = vsel %vm1940, %v1882, 0
        %v1967 = vsel %vm1940, %v1884, 0
        %v1969 = vsel %vm1940, %v1886, 0
        %v1971 = vsel %vm1940, %v1888, 0
        %v1973 = vsel %vm1940, %v1890, 0
        %v1975 = vsel %vm1940, %v1892, 0
        %v1977 = vsel %vm1940, %v1894, 0
        %v1979 = vsel %vm1940, %v1896, 0
        %v1981 = vsel %vm1940, %v1898, 0
        %v1983 = vsel %vm1940, %v1900, 0
        %v1985 = vsel %vm1940, %v1902, 0
        %v1987 = vsel %vm1940, %v1904, 0
        %v1989 = vsel %vm1940, %v1906, 0
        %v1991 = vsel %vm1940, %v1908, 0
        %v1993 = vsel %vm1940, %v1910, 0
        %v1995 = vsel %vm1940, %v1912, 0
        %vm1997 = vcmask 1041408
        %v1999 = vsel %vm1997, %v1937, 0
        %2001 = vmatprep.subr.bf16.mxu0 0
        %2002 = vmatpush1.bf16.msra.mxu0 %v1935
        %2003 = vmatprep.subr.bf16.mxu0 0
        %2004 = vmatpush1.bf16.msra.mxu0 %v1936
        %2005 = vmatprep.subr.bf16.mxu0 0
        %2006 = vmatpush1.bf16.msra.mxu0 %v1999
        %2007 = vmatprep.subr.bf16.mxu0 0
        %2008 = vmatpush1.bf16.msra.mxu0 0
        %2009 = vmatprep.subr.bf16.mxu0 0
        %2010 = vmatpush1.bf16.msra.mxu0 0
        %2011 = vmatprep.subr.bf16.mxu0 0
        %2012 = vmatpush1.bf16.msra.mxu0 0
        %2013 = vmatprep.subr.bf16.mxu0 0
        %2014 = vmatpush1.bf16.msra.mxu0 0
        %2015 = vmatprep.subr.bf16.mxu0 0
        %2016 = vmatpush1.bf16.msra.mxu0 0
        %2017 = vmatprep.subr.bf16.mxu0 0
        %2018 = vmatpush1.bf16.msra.mxu0 0
        %2019 = vmatprep.subr.bf16.mxu0 0
        %2020 = vmatpush1.bf16.msra.mxu0 0
        %2021 = vmatprep.subr.bf16.mxu0 0
        %2022 = vmatpush1.bf16.msra.mxu0 0
        %2023 = vmatprep.subr.bf16.mxu0 0
        %2024 = vmatpush1.bf16.msra.mxu0 0
        %2025 = vmatprep.subr.bf16.mxu0 0
        %2026 = vmatpush1.bf16.msra.mxu0 0
        %2027 = vmatprep.subr.bf16.mxu0 0
        %2028 = vmatpush1.bf16.msra.mxu0 0
        %2029 = vmatprep.subr.bf16.mxu0 0
        %2030 = vmatpush1.bf16.msra.mxu0 0
        %2031 = vmatprep.subr.bf16.mxu0 0
        %2032 = vmatpush1.bf16.msra.mxu0 0
        %2033 = vmatprep.mubr.bf16.mxu0 0
        %2034 = vmatmul.mubr.bf16.gmra.mrb[0].mxu0 %v1941
        %v2035 = vpop.f32.mrb[0].mxu0
        %v2036 = vadd.f32 %v1923, %v2035
        %v2037 = vpop.f32.mrb[0].mxu0
        %v2038 = vpop.f32.mrb[0].mxu0
        %v2039 = vadd.f32 %v1923, %v2038
        %v2040 = vpop.f32.mrb[0].mxu0
        %2041 = vmatprep.mubr.bf16.mxu0 0
        %2042 = vmatmul.mubr.bf16.gmra.mrb[0].mxu0 %v1943
        %v2043 = vpop.f32.mrb[0].mxu0
        %v2044 = vadd.f32 %v1923, %v2043
        %v2045 = vpop.f32.mrb[0].mxu0
        %v2046 = vpop.f32.mrb[0].mxu0
        %v2047 = vadd.f32 %v1923, %v2046
        %v2048 = vpop.f32.mrb[0].mxu0
        %2049 = vmatprep.mubr.bf16.mxu0 0
        %2050 = vmatmul.mubr.bf16.gmra.mrb[0].mxu0 %v1945
        %v2051 = vpop.f32.mrb[0].mxu0
        %v2052 = vadd.f32 %v1923, %v2051
        %v2053 = vpop.f32.mrb[0].mxu0
        %v2054 = vpop.f32.mrb[0].mxu0
        %v2055 = vadd.f32 %v1923, %v2054
        %v2056 = vpop.f32.mrb[0].mxu0
        %2057 = vmatprep.mubr.bf16.mxu0 0
        %2058 = vmatmul.mubr.bf16.gmra.mrb[0].mxu0 %v1947
        %v2059 = vpop.f32.mrb[0].mxu0
        %v2060 = vadd.f32 %v1923, %v2059
        %v2061 = vpop.f32.mrb[0].mxu0
        %v2062 = vpop.f32.mrb[0].mxu0
        %v2063 = vadd.f32 %v1923, %v2062
        %v2064 = vpop.f32.mrb[0].mxu0
        %2065 = vmatprep.mubr.bf16.mxu0 0
        %2066 = vmatmul.mubr.bf16.gmra.mrb[0].mxu0 %v1949
        %v2067 = vpop.f32.mrb[0].mxu0
        %v2068 = vadd.f32 %v1923, %v2067
        %v2069 = vpop.f32.mrb[0].mxu0
        %v2070 = vpop.f32.mrb[0].mxu0
        %v2071 = vadd.f32 %v1923, %v2070
        %v2072 = vpop.f32.mrb[0].mxu0
        %2073 = vmatprep.mubr.bf16.mxu0 0
        %2074 = vmatmul.mubr.bf16.gmra.mrb[0].mxu0 %v1951
        %v2075 = vpop.f32.mrb[0].mxu0
        %v2076 = vadd.f32 %v1923, %v2075
        %v2077 = vpop.f32.mrb[0].mxu0
        %v2078 = vpop.f32.mrb[0].mxu0
        %v2079 = vadd.f32 %v1923, %v2078
        %v2080 = vpop.f32.mrb[0].mxu0
        %2081 = vmatprep.mubr.bf16.mxu0 0
        %2082 = vmatmul.mubr.bf16.gmra.mrb[0].mxu0 %v1953
        %v2083 = vpop.f32.mrb[0].mxu0
        %v2084 = vadd.f32 %v1923, %v2083
        %v2085 = vpop.f32.mrb[0].mxu0
        %v2086 = vpop.f32.mrb[0].mxu0
        %v2087 = vadd.f32 %v1923, %v2086
        %v2088 = vpop.f32.mrb[0].mxu0
        %2089 = vmatprep.mubr.bf16.mxu0 0
        %2090 = vmatmul.mubr.bf16.gmra.mrb[0].mxu0 %v1955
        %v2091 = vpop.f32.mrb[0].mxu0
        %v2092 = vadd.f32 %v1923, %v2091
        %v2093 = vpop.f32.mrb[0].mxu0
        %v2094 = vpop.f32.mrb[0].mxu0
        %v2095 = vadd.f32 %v1923, %v2094
        %v2096 = vpop.f32.mrb[0].mxu0
        %2097 = vmatprep.mubr.bf16.mxu0 0
        %2098 = vmatmul.mubr.bf16.gmra.mrb[0].mxu0 %v1957
        %v2099 = vpop.f32.mrb[0].mxu0
        %v2100 = vadd.f32 %v1923, %v2099
        %v2101 = vpop.f32.mrb[0].mxu0
        %v2102 = vpop.f32.mrb[0].mxu0
        %v2103 = vadd.f32 %v1923, %v2102
        %v2104 = vpop.f32.mrb[0].mxu0
        %2105 = vmatprep.mubr.bf16.mxu0 0
        %2106 = vmatmul.mubr.bf16.gmra.mrb[0].mxu0 %v1959
        %v2107 = vpop.f32.mrb[0].mxu0
        %v2108 = vadd.f32 %v1923, %v2107
        %v2109 = vpop.f32.mrb[0].mxu0
        %v2110 = vpop.f32.mrb[0].mxu0
        %v2111 = vadd.f32 %v1923, %v2110
        %v2112 = vpop.f32.mrb[0].mxu0
        %2113 = vmatprep.mubr.bf16.mxu0 0
        %2114 = vmatmul.mubr.bf16.gmra.mrb[0].mxu0 %v1961
        %v2115 = vpop.f32.mrb[0].mxu0
        %v2116 = vadd.f32 %v1923, %v2115
        %v2117 = vpop.f32.mrb[0].mxu0
        %v2118 = vpop.f32.mrb[0].mxu0
        %v2119 = vadd.f32 %v1923, %v2118
        %v2120 = vpop.f32.mrb[0].mxu0
        %2121 = vmatprep.mubr.bf16.mxu0 0
        %2122 = vmatmul.mubr.bf16.gmra.mrb[0].mxu0 %v1963
        %v2123 = vpop.f32.mrb[0].mxu0
        %v2124 = vadd.f32 %v1923, %v2123
        %v2125 = vpop.f32.mrb[0].mxu0
        %v2126 = vpop.f32.mrb[0].mxu0
        %v2127 = vadd.f32 %v1923, %v2126
        %v2128 = vpop.f32.mrb[0].mxu0
        %2129 = vmatprep.mubr.bf16.mxu0 0
        %2130 = vmatmul.mubr.bf16.gmra.mrb[0].mxu0 %v1965
        %v2131 = vpop.f32.mrb[0].mxu0
        %v2132 = vadd.f32 %v1923, %v2131
        %v2133 = vpop.f32.mrb[0].mxu0
        %v2134 = vpop.f32.mrb[0].mxu0
        %v2135 = vadd.f32 %v1923, %v2134
        %v2136 = vpop.f32.mrb[0].mxu0
        %2137 = vmatprep.mubr.bf16.mxu0 0
        %2138 = vmatmul.mubr.bf16.gmra.mrb[0].mxu0 %v1967
        %v2139 = vpop.f32.mrb[0].mxu0
        %v2140 = vadd.f32 %v1923, %v2139
        %v2141 = vpop.f32.mrb[0].mxu0
        %v2142 = vpop.f32.mrb[0].mxu0
        %v2143 = vadd.f32 %v1923, %v2142
        %v2144 = vpop.f32.mrb[0].mxu0
        %2145 = vmatprep.mubr.bf16.mxu0 0
        %2146 = vmatmul.mubr.bf16.gmra.mrb[0].mxu0 %v1969
        %v2147 = vpop.f32.mrb[0].mxu0
        %v2148 = vadd.f32 %v1923, %v2147
        %v2149 = vpop.f32.mrb[0].mxu0
        %v2150 = vpop.f32.mrb[0].mxu0
        %v2151 = vadd.f32 %v1923, %v2150
        %v2152 = vpop.f32.mrb[0].mxu0
        %2153 = vmatprep.mubr.bf16.mxu0 0
        %2154 = vmatmul.mubr.bf16.gmra.mrb[0].mxu0 %v1971
        %v2155 = vpop.f32.mrb[0].mxu0
        %v2156 = vadd.f32 %v1923, %v2155
        %v2157 = vpop.f32.mrb[0].mxu0
        %v2158 = vpop.f32.mrb[0].mxu0
        %v2159 = vadd.f32 %v1923, %v2158
        %v2160 = vpop.f32.mrb[0].mxu0
        %2161 = vmatprep.mubr.bf16.mxu0 0
        %2162 = vmatmul.mubr.bf16.gmra.mrb[0].mxu0 %v1973
        %v2163 = vpop.f32.mrb[0].mxu0
        %v2164 = vadd.f32 %v1923, %v2163
        %v2165 = vpop.f32.mrb[0].mxu0
        %v2166 = vpop.f32.mrb[0].mxu0
        %v2167 = vadd.f32 %v1923, %v2166
        %v2168 = vpop.f32.mrb[0].mxu0
        %2169 = vmatprep.mubr.bf16.mxu0 0
        %2170 = vmatmul.mubr.bf16.gmra.mrb[0].mxu0 %v1975
        %v2171 = vpop.f32.mrb[0].mxu0
        %v2172 = vadd.f32 %v1923, %v2171
        %v2173 = vpop.f32.mrb[0].mxu0
        %v2174 = vpop.f32.mrb[0].mxu0
        %v2175 = vadd.f32 %v1923, %v2174
        %v2176 = vpop.f32.mrb[0].mxu0
        %2177 = vmatprep.mubr.bf16.mxu0 0
        %2178 = vmatmul.mubr.bf16.gmra.mrb[0].mxu0 %v1977
        %v2179 = vpop.f32.mrb[0].mxu0
        %v2180 = vadd.f32 %v1923, %v2179
        %v2181 = vpop.f32.mrb[0].mxu0
        %v2182 = vpop.f32.mrb[0].mxu0
        %v2183 = vadd.f32 %v1923, %v2182
        %v2184 = vpop.f32.mrb[0].mxu0
        %2185 = vmatprep.mubr.bf16.mxu0 0
        %2186 = vmatmul.mubr.bf16.gmra.mrb[0].mxu0 %v1979
        %v2187 = vpop.f32.mrb[0].mxu0
        %v2188 = vadd.f32 %v1923, %v2187
        %v2189 = vpop.f32.mrb[0].mxu0
        %v2190 = vpop.f32.mrb[0].mxu0
        %v2191 = vadd.f32 %v1923, %v2190
        %v2192 = vpop.f32.mrb[0].mxu0
        %2193 = vmatprep.mubr.bf16.mxu0 0
        %2194 = vmatmul.mubr.bf16.gmra.mrb[0].mxu0 %v1981
        %v2195 = vpop.f32.mrb[0].mxu0
        %v2196 = vadd.f32 %v1923, %v2195
        %v2197 = vpop.f32.mrb[0].mxu0
        %v2198 = vpop.f32.mrb[0].mxu0
        %v2199 = vadd.f32 %v1923, %v2198
        %v2200 = vpop.f32.mrb[0].mxu0
        %2201 = vmatprep.mubr.bf16.mxu0 0
        %2202 = vmatmul.mubr.bf16.gmra.mrb[0].mxu0 %v1983
        %v2203 = vpop.f32.mrb[0].mxu0
        %v2204 = vadd.f32 %v1923, %v2203
        %v2205 = vpop.f32.mrb[0].mxu0
        %v2206 = vpop.f32.mrb[0].mxu0
        %v2207 = vadd.f32 %v1923, %v2206
        %v2208 = vpop.f32.mrb[0].mxu0
        %2209 = vmatprep.mubr.bf16.mxu0 0
        %2210 = vmatmul.mubr.bf16.gmra.mrb[0].mxu0 %v1985
        %v2211 = vpop.f32.mrb[0].mxu0
        %v2212 = vadd.f32 %v1923, %v2211
        %v2213 = vpop.f32.mrb[0].mxu0
        %v2214 = vpop.f32.mrb[0].mxu0
        %v2215 = vadd.f32 %v1923, %v2214
        %v2216 = vpop.f32.mrb[0].mxu0
        %2217 = vmatprep.mubr.bf16.mxu0 0
        %2218 = vmatmul.mubr.bf16.gmra.mrb[0].mxu0 %v1987
        %v2219 = vpop.f32.mrb[0].mxu0
        %v2220 = vadd.f32 %v1923, %v2219
        %v2221 = vpop.f32.mrb[0].mxu0
        %v2222 = vpop.f32.mrb[0].mxu0
        %v2223 = vadd.f32 %v1923, %v2222
        %v2224 = vpop.f32.mrb[0].mxu0
        %2225 = vmatprep.mubr.bf16.mxu0 0
        %2226 = vmatmul.mubr.bf16.gmra.mrb[0].mxu0 %v1989
        %v2227 = vpop.f32.mrb[0].mxu0
        %v2228 = vadd.f32 %v1923, %v2227
        %v2229 = vpop.f32.mrb[0].mxu0
        %v2230 = vpop.f32.mrb[0].mxu0
        %v2231 = vadd.f32 %v1923, %v2230
        %v2232 = vpop.f32.mrb[0].mxu0
        %2233 = vmatprep.mubr.bf16.mxu0 0
        %2234 = vmatmul.mubr.bf16.gmra.mrb[0].mxu0 %v1991
        %v2235 = vpop.f32.mrb[0].mxu0
        %v2236 = vadd.f32 %v1923, %v2235
        %v2237 = vpop.f32.mrb[0].mxu0
        %v2238 = vpop.f32.mrb[0].mxu0
        %v2239 = vadd.f32 %v1923, %v2238
        %v2240 = vpop.f32.mrb[0].mxu0
        %2241 = vmatprep.mubr.bf16.mxu0 0
        %2242 = vmatmul.mubr.bf16.gmra.mrb[0].mxu0 %v1993
        %v2243 = vpop.f32.mrb[0].mxu0
        %v2244 = vadd.f32 %v1923, %v2243
        %v2245 = vpop.f32.mrb[0].mxu0
        %v2246 = vpop.f32.mrb[0].mxu0
        %v2247 = vadd.f32 %v1923, %v2246
        %v2248 = vpop.f32.mrb[0].mxu0
        %2249 = vmatprep.mubr.bf16.mxu0 0
        %2250 = vmatmul.mubr.bf16.gmra.mrb[0].mxu0 %v1995
        %v2251 = vpop.f32.mrb[0].mxu0
        %v2252 = vadd.f32 %v1923, %v2251
        %v2253 = vpop.f32.mrb[0].mxu0
        %v2254 = vpop.f32.mrb[0].mxu0
        %v2255 = vadd.f32 %v1923, %v2254
        %v2256 = vpop.f32.mrb[0].mxu0
        %2257 = vdwg.mxu0
        %v2258 = vmax.f32 %v2036, 0.0
        %v2259 = vmax.f32 %v2039, 0.0
        %v2260 = vmax.f32 %v2044, 0.0
        %v2261 = vmax.f32 %v2047, 0.0
        %v2262 = vmax.f32 %v2052, 0.0
        %v2263 = vmax.f32 %v2055, 0.0
        %v2264 = vmax.f32 %v2060, 0.0
        %v2265 = vmax.f32 %v2063, 0.0
        %v2266 = vmax.f32 %v2068, 0.0
        %v2267 = vmax.f32 %v2071, 0.0
        %v2268 = vmax.f32 %v2076, 0.0
        %v2269 = vmax.f32 %v2079, 0.0
        %v2270 = vmax.f32 %v2084, 0.0
        %v2271 = vmax.f32 %v2087, 0.0
        %v2272 = vmax.f32 %v2092, 0.0
        %v2273 = vmax.f32 %v2095, 0.0
        %v2274 = vmax.f32 %v2100, 0.0
        %v2275 = vmax.f32 %v2103, 0.0
        %v2276 = vmax.f32 %v2108, 0.0
        %v2277 = vmax.f32 %v2111, 0.0
        %v2278 = vmax.f32 %v2116, 0.0
        %v2279 = vmax.f32 %v2119, 0.0
        %v2280 = vmax.f32 %v2124, 0.0
        %v2281 = vmax.f32 %v2127, 0.0
        %v2282 = vmax.f32 %v2132, 0.0
        %v2283 = vmax.f32 %v2135, 0.0
        %v2284 = vmax.f32 %v2140, 0.0
        %v2285 = vmax.f32 %v2143, 0.0
        %v2286 = vmax.f32 %v2148, 0.0
        %v2287 = vmax.f32 %v2151, 0.0
        %v2288 = vmax.f32 %v2156, 0.0
        %v2289 = vmax.f32 %v2159, 0.0
        %v2290 = vmax.f32 %v2164, 0.0
        %v2291 = vmax.f32 %v2167, 0.0
        %v2292 = vmax.f32 %v2172, 0.0
        %v2293 = vmax.f32 %v2175, 0.0
        %v2294 = vmax.f32 %v2180, 0.0
        %v2295 = vmax.f32 %v2183, 0.0
        %v2296 = vmax.f32 %v2188, 0.0
        %v2297 = vmax.f32 %v2191, 0.0
        %v2298 = vmax.f32 %v2196, 0.0
        %v2299 = vmax.f32 %v2199, 0.0
        %v2300 = vmax.f32 %v2204, 0.0
        %v2301 = vmax.f32 %v2207, 0.0
        %v2302 = vmax.f32 %v2212, 0.0
        %v2303 = vmax.f32 %v2215, 0.0
        %v2304 = vmax.f32 %v2220, 0.0
        %v2305 = vmax.f32 %v2223, 0.0
        %v2306 = vmax.f32 %v2228, 0.0
        %v2307 = vmax.f32 %v2231, 0.0
        %v2308 = vmax.f32 %v2236, 0.0
        %v2309 = vmax.f32 %v2239, 0.0
        %v2310 = vmax.f32 %v2244, 0.0
        %v2311 = vmax.f32 %v2247, 0.0
        %v2312 = vmax.f32 %v2252, 0.0
        %v2313 = vmax.f32 %v2255, 0.0
        %v2314 = vpack.c.bf16 %v2259, %v2258
        %v2315 = vpack.c.bf16 %v2261, %v2260
        %v2316 = vpack.c.bf16 %v2263, %v2262
        %v2317 = vpack.c.bf16 %v2265, %v2264
        %v2318 = vpack.c.bf16 %v2267, %v2266
        %v2319 = vpack.c.bf16 %v2269, %v2268
        %v2320 = vpack.c.bf16 %v2271, %v2270
        %v2321 = vpack.c.bf16 %v2273, %v2272
        %v2322 = vpack.c.bf16 %v2275, %v2274
        %v2323 = vpack.c.bf16 %v2277, %v2276
        %v2324 = vpack.c.bf16 %v2279, %v2278
        %v2325 = vpack.c.bf16 %v2281, %v2280
        %v2326 = vpack.c.bf16 %v2283, %v2282
        %v2327 = vpack.c.bf16 %v2285, %v2284
        %v2328 = vpack.c.bf16 %v2287, %v2286
        %v2329 = vpack.c.bf16 %v2289, %v2288
        %v2330 = vpack.c.bf16 %v2291, %v2290
        %v2331 = vpack.c.bf16 %v2293, %v2292
        %v2332 = vpack.c.bf16 %v2295, %v2294
        %v2333 = vpack.c.bf16 %v2297, %v2296
        %v2334 = vpack.c.bf16 %v2299, %v2298
        %v2335 = vpack.c.bf16 %v2301, %v2300
        %v2336 = vpack.c.bf16 %v2303, %v2302
        %v2337 = vpack.c.bf16 %v2305, %v2304
        %v2338 = vpack.c.bf16 %v2307, %v2306
        %v2339 = vpack.c.bf16 %v2309, %v2308
        %v2340 = vpack.c.bf16 %v2311, %v2310
        %v2341 = vpack.c.bf16 %v2313, %v2312
        %v2370 = vunpack.c.l.b16 %v2314
        %v2371 = vunpack.c.h.b16 %v2314
        %v2372 = vunpack.c.l.b16 %v2315
        %v2373 = vunpack.c.h.b16 %v2315
        %v2374 = vunpack.c.l.b16 %v2316
        %v2375 = vunpack.c.h.b16 %v2316
        %v2376 = vunpack.c.l.b16 %v2317
        %v2377 = vunpack.c.h.b16 %v2317
        %v2378 = vunpack.c.l.b16 %v2318
        %v2379 = vunpack.c.h.b16 %v2318
        %v2380 = vunpack.c.l.b16 %v2319
        %v2381 = vunpack.c.h.b16 %v2319
        %v2382 = vunpack.c.l.b16 %v2320
        %v2383 = vunpack.c.h.b16 %v2320
        %v2384 = vunpack.c.l.b16 %v2321
        %v2385 = vunpack.c.h.b16 %v2321
        %v2386 = vunpack.c.l.b16 %v2322
        %v2387 = vunpack.c.h.b16 %v2322
        %v2388 = vunpack.c.l.b16 %v2323
        %v2389 = vunpack.c.h.b16 %v2323
        %v2390 = vunpack.c.l.b16 %v2324
        %v2391 = vunpack.c.h.b16 %v2324
        %v2392 = vunpack.c.l.b16 %v2325
        %v2393 = vunpack.c.h.b16 %v2325
        %v2394 = vunpack.c.l.b16 %v2326
        %v2395 = vunpack.c.h.b16 %v2326
        %v2396 = vunpack.c.l.b16 %v2327
        %v2397 = vunpack.c.h.b16 %v2327
        %v2398 = vunpack.c.l.b16 %v2328
        %v2399 = vunpack.c.h.b16 %v2328
        %v2400 = vunpack.c.l.b16 %v2329
        %v2401 = vunpack.c.h.b16 %v2329
        %v2402 = vunpack.c.l.b16 %v2330
        %v2403 = vunpack.c.h.b16 %v2330
        %v2404 = vunpack.c.l.b16 %v2331
        %v2405 = vunpack.c.h.b16 %v2331
        %v2406 = vunpack.c.l.b16 %v2332
        %v2407 = vunpack.c.h.b16 %v2332
        %v2408 = vunpack.c.l.b16 %v2333
        %v2409 = vunpack.c.h.b16 %v2333
        %v2410 = vunpack.c.l.b16 %v2334
        %v2411 = vunpack.c.h.b16 %v2334
        %v2412 = vunpack.c.l.b16 %v2335
        %v2413 = vunpack.c.h.b16 %v2335
        %v2414 = vunpack.c.l.b16 %v2336
        %v2415 = vunpack.c.h.b16 %v2336
        %v2416 = vunpack.c.l.b16 %v2337
        %v2417 = vunpack.c.h.b16 %v2337
        %v2418 = vunpack.c.l.b16 %v2338
        %v2419 = vunpack.c.h.b16 %v2338
        %v2420 = vunpack.c.l.b16 %v2339
        %v2421 = vunpack.c.h.b16 %v2339
        %v2422 = vunpack.c.l.b16 %v2340
        %v2423 = vunpack.c.h.b16 %v2340
        %v2424 = vunpack.c.l.b16 %v2341
        %v2425 = vunpack.c.h.b16 %v2341
        %v2426 = vpack.c.b16 %v2370, %v2370
        %v2427 = vpack.c.b16 %v2371, %v2371
        %v2428 = vpack.c.b16 %v2372, %v2372
        %v2429 = vpack.c.b16 %v2373, %v2373
        %v2430 = vpack.c.b16 %v2374, %v2374
        %v2431 = vpack.c.b16 %v2375, %v2375
        %v2432 = vpack.c.b16 %v2376, %v2376
        %v2433 = vpack.c.b16 %v2377, %v2377
        %v2434 = vpack.c.b16 %v2378, %v2378
        %v2435 = vpack.c.b16 %v2379, %v2379
        %v2436 = vpack.c.b16 %v2380, %v2380
        %v2437 = vpack.c.b16 %v2381, %v2381
        %v2438 = vpack.c.b16 %v2382, %v2382
        %v2439 = vpack.c.b16 %v2383, %v2383
        %v2440 = vpack.c.b16 %v2384, %v2384
        %v2441 = vpack.c.b16 %v2385, %v2385
        %v2442 = vpack.c.b16 %v2386, %v2386
        %v2443 = vpack.c.b16 %v2387, %v2387
        %v2444 = vpack.c.b16 %v2388, %v2388
        %v2445 = vpack.c.b16 %v2389, %v2389
        %v2446 = vpack.c.b16 %v2390, %v2390
        %v2447 = vpack.c.b16 %v2391, %v2391
        %v2448 = vpack.c.b16 %v2392, %v2392
        %v2449 = vpack.c.b16 %v2393, %v2393
        %v2450 = vpack.c.b16 %v2394, %v2394
        %v2451 = vpack.c.b16 %v2395, %v2395
        %v2452 = vpack.c.b16 %v2396, %v2396
        %v2453 = vpack.c.b16 %v2397, %v2397
        %v2454 = vpack.c.b16 %v2398, %v2398
        %v2455 = vpack.c.b16 %v2399, %v2399
        %v2456 = vpack.c.b16 %v2400, %v2400
        %v2457 = vpack.c.b16 %v2401, %v2401
        %v2458 = vpack.c.b16 %v2402, %v2402
        %v2459 = vpack.c.b16 %v2403, %v2403
        %v2460 = vpack.c.b16 %v2404, %v2404
        %v2461 = vpack.c.b16 %v2405, %v2405
        %v2462 = vpack.c.b16 %v2406, %v2406
        %v2463 = vpack.c.b16 %v2407, %v2407
        %v2464 = vpack.c.b16 %v2408, %v2408
        %v2465 = vpack.c.b16 %v2409, %v2409
        %v2466 = vpack.c.b16 %v2410, %v2410
        %v2467 = vpack.c.b16 %v2411, %v2411
        %v2468 = vpack.c.b16 %v2412, %v2412
        %v2469 = vpack.c.b16 %v2413, %v2413
        %v2470 = vpack.c.b16 %v2414, %v2414
        %v2471 = vpack.c.b16 %v2415, %v2415
        %v2472 = vpack.c.b16 %v2416, %v2416
        %v2473 = vpack.c.b16 %v2417, %v2417
        %v2474 = vpack.c.b16 %v2418, %v2418
        %v2475 = vpack.c.b16 %v2419, %v2419
        %v2476 = vpack.c.b16 %v2420, %v2420
        %v2477 = vpack.c.b16 %v2421, %v2421
        %v2478 = vpack.c.b16 %v2422, %v2422
        %v2479 = vpack.c.b16 %v2423, %v2423
        %v2480 = vpack.c.b16 %v2424, %v2424
        %v2481 = vpack.c.b16 %v2425, %v2425
        %2538 = vst [vmem:[%s217] sm:$0xf] %v2426
        %2539 = vst [vmem:[%s217 + $0x4] sm:$0xf] %v2427
        %2540 = vst [vmem:[%s217 + $0x8] sm:$0xf] %v2428
        %2541 = vst [vmem:[%s217 + $0xc] sm:$0xf] %v2429
        %2542 = vst [vmem:[%s217 + $0x10] sm:$0xf] %v2430
        %2543 = vst [vmem:[%s217 + $0x14] sm:$0xf] %v2431
        %2544 = vst [vmem:[%s217 + $0x18] sm:$0xf] %v2432
        %2545 = vst [vmem:[%s217 + $0x1c] sm:$0xf] %v2433
        %2546 = vst [vmem:[%s217 + $0x20] sm:$0xf] %v2434
        %2547 = vst [vmem:[%s217 + $0x24] sm:$0xf] %v2435
        %2548 = vst [vmem:[%s217 + $0x28] sm:$0xf] %v2436
        %2549 = vst [vmem:[%s217 + $0x2c] sm:$0xf] %v2437
        %2550 = vst [vmem:[%s217 + $0x30] sm:$0xf] %v2438
        %2551 = vst [vmem:[%s217 + $0x34] sm:$0xf] %v2439
        %2552 = vst [vmem:[%s217 + $0x38] sm:$0xf] %v2440
        %2553 = vst [vmem:[%s217 + $0x3c] sm:$0xf] %v2441
        %2554 = vst [vmem:[%s217 + $0x40] sm:$0xf] %v2442
        %2555 = vst [vmem:[%s217 + $0x44] sm:$0xf] %v2443
        %2556 = vst [vmem:[%s217 + $0x48] sm:$0xf] %v2444
        %2557 = vst [vmem:[%s217 + $0x4c] sm:$0xf] %v2445
        %2558 = vst [vmem:[%s217 + $0x50] sm:$0xf] %v2446
        %2559 = vst [vmem:[%s217 + $0x54] sm:$0xf] %v2447
        %2560 = vst [vmem:[%s217 + $0x58] sm:$0xf] %v2448
        %2561 = vst [vmem:[%s217 + $0x5c] sm:$0xf] %v2449
        %2562 = vst [vmem:[%s217 + $0x60] sm:$0xf] %v2450
        %2563 = vst [vmem:[%s217 + $0x64] sm:$0xf] %v2451
        %2564 = vst [vmem:[%s217 + $0x68] sm:$0xf] %v2452
        %2565 = vst [vmem:[%s217 + $0x6c] sm:$0xf] %v2453
        %2566 = vst [vmem:[%s217 + $0x70] sm:$0xf] %v2454
        %2567 = vst [vmem:[%s217 + $0x74] sm:$0xf] %v2455
        %2568 = vst [vmem:[%s217 + $0x78] sm:$0xf] %v2456
        %2569 = vst [vmem:[%s217 + $0x7c] sm:$0xf] %v2457
        %2570 = vst [vmem:[%s217 + $0x80] sm:$0xf] %v2458
        %2571 = vst [vmem:[%s217 + $0x84] sm:$0xf] %v2459
        %2572 = vst [vmem:[%s217 + $0x88] sm:$0xf] %v2460
        %2573 = vst [vmem:[%s217 + $0x8c] sm:$0xf] %v2461
        %2574 = vst [vmem:[%s217 + $0x90] sm:$0xf] %v2462
        %2575 = vst [vmem:[%s217 + $0x94] sm:$0xf] %v2463
        %2576 = vst [vmem:[%s217 + $0x98] sm:$0xf] %v2464
        %2577 = vst [vmem:[%s217 + $0x9c] sm:$0xf] %v2465
        %2578 = vst [vmem:[%s217 + $0xa0] sm:$0xf] %v2466
        %2579 = vst [vmem:[%s217 + $0xa4] sm:$0xf] %v2467
        %2580 = vst [vmem:[%s217 + $0xa8] sm:$0xf] %v2468
        %2581 = vst [vmem:[%s217 + $0xac] sm:$0xf] %v2469
        %2582 = vst [vmem:[%s217 + $0xb0] sm:$0xf] %v2470
        %2583 = vst [vmem:[%s217 + $0xb4] sm:$0xf] %v2471
        %2584 = vst [vmem:[%s217 + $0xb8] sm:$0xf] %v2472
        %2585 = vst [vmem:[%s217 + $0xbc] sm:$0xf] %v2473
        %2586 = vst [vmem:[%s217 + $0xc0] sm:$0xf] %v2474
        %2587 = vst [vmem:[%s217 + $0xc4] sm:$0xf] %v2475
        %2588 = vst [vmem:[%s217 + $0xc8] sm:$0xf] %v2476
        %2589 = vst [vmem:[%s217 + $0xcc] sm:$0xf] %v2477
        %2590 = vst [vmem:[%s217 + $0xd0] sm:$0xf] %v2478
        %2591 = vst [vmem:[%s217 + $0xd4] sm:$0xf] %v2479
        %2592 = vst [vmem:[%s217 + $0xd8] sm:$0xf] %v2480
        %2593 = vst [vmem:[%s217 + $0xdc] sm:$0xf] %v2481
        %s2594 = sand.u32 %s124, 1
        %s2595 = scalar_lea.sflag [#allocation3], %s2594
        %s2596 = sand.u32 %s124, 1
        %s2597 = smul.addr %s2596, 224
        %s2598 = scalar_lea.vmem [#allocation2], %s2597
        // Predicated region
        $region37: #{tpu_custom_call.1} parent=35 // pred_check
          %p2599 = pneg %p134
        $region38: #{tpu_custom_call.1} parent=35 // pred_check_branch
          %2601 = sbr.rel (%p2599) target = $region40
        $region39: #{tpu_custom_call.1} parent=35 // pred_region
          %s2602 = smul.u32 56, %s18
          %s2604 = ssub.s32 3584, 3584
          %2605 = vsyncadd %s2595, %s2604
          %s2606 = smul.addr %s2602, 64
          %s2607 = scalar_lea.hbm %s4, %s2606
          %s2608 = sshll.u32 %s2598, 4
          %s2609 = int_to_ptr.vmem [resolvable:$true] %s2608
          %2614 = dma.vmem_to_hbm [thread:$0]  %s2609, 3584, %s2607, %s2595, 64, 64, 4
        $region40: #{tpu_custom_call.1} parent=35 // pred_fallthru
          _
      $region36: #{tpu_custom_call.1} parent=5 // pred_fallthru
        _
      %p2615 = scmp.le.s32.totalorder 2, %s13
      // Predicated region
      $region41: #{tpu_custom_call.1} parent=5 // pred_check
        %p2616 = pneg %p2615
      $region42: #{tpu_custom_call.1} parent=5 // pred_check_branch
        %2618 = sbr.rel (%p2616) target = $region44
      $region43: #{tpu_custom_call.1} parent=5 // pred_region
        %s2619 = ssub.s32 %s13, 2
        // Predicated region
        $region45: #{tpu_custom_call.1} parent=43 // pred_check
          %p2620 = pneg %p140
        $region46: #{tpu_custom_call.1} parent=43 // pred_check_branch
          %2622 = sbr.rel (%p2620) target = $region48
        $region47: #{tpu_custom_call.1} parent=43 // pred_region
          %s2623 = sand.u32 %s125, 1
          %s2624 = scalar_lea.sflag [#allocation3], %s2623
          %s2625 = sand.u32 %s125, 1
          %s2626 = smul.addr %s2625, 224
          %s2627 = scalar_lea.vmem [#allocation2], %s2626
          %2628 = dma.done %s2624, 3584
        $region48: #{tpu_custom_call.1} parent=43 // pred_fallthru
          _
      $region44: #{tpu_custom_call.1} parent=5 // pred_fallthru
        _
    $region6: #{tpu_custom_call.1} parent=1 // loop_footer
      %s17 = sadd.s32 1, %s13
    $region7: #{tpu_custom_call.1} parent=1 // loop_footer_branch
      %12 = sbr.rel target = $region3
    $region8: #{tpu_custom_call.1} parent=1 // loop_exit
      _
    %2629 = vsyncpa [#allocation3], 1
    %s2630 = scalar_lea.sflag [#allocation3], 1
    %2631 = vsyncpa %s2630, 1

</llo_original>
